<compile_context>
chip_gen: v7x
topology: tpu7x:2x2x1
jax: 0.10.0
libtpu: 0.0.40
codegen_flags: <defaults>
</compile_context>

<pallas_src>
import functools

import jax
import jax.numpy as jnp
from jax.experimental import pallas as pl
from jax.experimental.pallas import tpu as pltpu

ACT_DTYPE = jnp.bfloat16            # activations / weights on the MXU path
VMEM_LIMIT = 48 * 1024 * 1024       # > scoped default on v5e/v6e/v7x, < v7x 64 MiB phys


def _round_up(x, m):
    return ((x + m - 1) // m) * m


# ----------------------------------------------------------------------------
# Pallas kernels
# ----------------------------------------------------------------------------
def _linear_kernel(x_ref, w_ref, b_ref, o_ref, *, activation):
    # bf16 x / w feed the MXU; accumulate in f32.
    y = jnp.dot(x_ref[...], w_ref[...], preferred_element_type=jnp.float32)
    y = y + b_ref[...].astype(jnp.float32)
    if activation == "gelu":
        # sigmoid-GELU: x * sigmoid(1.702 x) -- exp + reciprocal go to the EUP slot,
        # keeping the VALU slot free for the MXU-bound FF1 tile.
        # TODO(synk): HF DistilBERT uses the erf GELU; this is an approximation.
        y = y * pl.reciprocal(1.0 + jnp.exp(-1.702 * y), approx=True)
    o_ref[...] = y.astype(o_ref.dtype)


def linear(x, w, b, activation=None, block_rows=512):
    """y = act(x @ w + b); x:(M,K) bf16, w:(K,N) bf16, b:(N,) f32 -> (M,N) bf16."""
    M, K = x.shape
    N = w.shape[1]
    bm = min(block_rows, _round_up(M, 16))          # bf16 packs 16 sublanes per vreg
    grid = (pl.cdiv(M, bm),)                        # masked tail block if M % bm != 0
    return pl.pallas_call(
        functools.partial(_linear_kernel, activation=activation),
        out_shape=jax.ShapeDtypeStruct((M, N), x.dtype),
        grid=grid,
        in_specs=[
            pl.BlockSpec((bm, K), lambda i: (i, 0)),   # activation rows: streamed
            # TODO(synk): pipeline_mode=pl.Buffered(1) on the invariant weight would
            # save one weight-sized VMEM buffer on v7x.
            pl.BlockSpec((K, N), lambda i: (0, 0)),    # weight: resident across grid
            pl.BlockSpec((1, N), lambda i: (0, 0)),
        ],
        out_specs=pl.BlockSpec((bm, N), lambda i: (i, 0)),
        compiler_params=pltpu.CompilerParams(
            dimension_semantics=("parallel",),
            vmem_limit_bytes=VMEM_LIMIT),
    )(x, w, b.reshape(1, N))


def _layernorm_kernel(*refs, eps, with_residual):
    if with_residual:
        x_ref, r_ref, g_ref, b_ref, o_ref = refs
        x = x_ref[...].astype(jnp.float32) + r_ref[...].astype(jnp.float32)
    else:
        x_ref, g_ref, b_ref, o_ref = refs
        x = x_ref[...].astype(jnp.float32)
    mu = jnp.mean(x, axis=-1, keepdims=True)
    var = jnp.mean(jnp.square(x - mu), axis=-1, keepdims=True)
    y = (x - mu) * jax.lax.rsqrt(var + eps)
    o_ref[...] = (y * g_ref[...] + b_ref[...]).astype(o_ref.dtype)


def layernorm(x, g, b, residual=None, eps=1e-12, block_rows=512, out_dtype=None):
    """LayerNorm(x [+ residual]) over the last dim; rows tiled across a parallel grid.

    out_dtype lets the (f32 <-> bf16) boundary casts fuse into this kernel instead of
    being separate full-slab XLA passes.
    """
    M, H = x.shape
    out_dtype = x.dtype if out_dtype is None else out_dtype
    bm = min(block_rows, _round_up(M, 16))
    grid = (pl.cdiv(M, bm),)
    row_spec = pl.BlockSpec((bm, H), lambda i: (i, 0))
    vec_spec = pl.BlockSpec((1, H), lambda i: (0, 0))
    with_res = residual is not None
    in_specs = [row_spec] + ([row_spec] if with_res else []) + [vec_spec, vec_spec]
    args = (x,) + ((residual,) if with_res else ()) + (g.reshape(1, H), b.reshape(1, H))
    return pl.pallas_call(
        functools.partial(_layernorm_kernel, eps=eps, with_residual=with_res),
        out_shape=jax.ShapeDtypeStruct((M, H), out_dtype),
        grid=grid,
        in_specs=in_specs,
        out_specs=row_spec,
        compiler_params=pltpu.CompilerParams(
            dimension_semantics=("parallel",),
            vmem_limit_bytes=VMEM_LIMIT),
    )(*args)


def _attention_kernel(q_ref, k_ref, v_ref, mbias_ref, o_ref, *, num_heads, head_dim):
    # One (batch, q-tile) per grid step; K/V for the whole sequence stay resident.
    # Q was pre-scaled by 1/sqrt(head_dim) via the folded QKV weights.
    q_all = q_ref[0]                            # (tq, H) bf16
    k_all = k_ref[0]                            # (S,  H) bf16
    v_all = v_ref[0]                            # (S,  H) bf16
    mb = mbias_ref[0].astype(jnp.float32)       # (1, S) additive mask bias
    pair = 2 if num_heads % 2 == 0 else 1       # 2 heads -> 128-lane dense stores
    for h0 in range(0, num_heads, pair):        # static unrolled loop over head pairs
        ctxs = []
        for h in range(h0, h0 + pair):
            q = q_all[:, h * head_dim:(h + 1) * head_dim]
            k = k_all[:, h * head_dim:(h + 1) * head_dim]
            v = v_all[:, h * head_dim:(h + 1) * head_dim]
            # scores: (tq, S) in f32, bf16 MXU inputs
            s = jax.lax.dot_general(q, k, (((1,), (1,)), ((), ())),
                                    preferred_element_type=jnp.float32)
            s = s + mb
            m = jnp.max(s, axis=-1, keepdims=True)
            p = jnp.exp(s - m)                                  # unnormalized probs
            l = jnp.sum(p, axis=-1, keepdims=True)
            ctx = jnp.dot(p.astype(v.dtype), v, preferred_element_type=jnp.float32)
            ctxs.append(ctx * (1.0 / l))        # deferred norm: (tq, dh), not (tq, S)
        blk = ctxs[0] if pair == 1 else jnp.concatenate(ctxs, axis=-1)
        o_ref[0, :, h0 * head_dim:(h0 + pair) * head_dim] = blk.astype(o_ref.dtype)
    # TODO(synk): for long sequences, tile the KV axis flash-style (online max/sum)
    # and pack head pairs into block-diagonal MXU calls for >50% utilization at dh=64.


def attention(qkv, mbias, num_heads, head_dim, block_q=256):
    """qkv: (B, S, 3H) bf16; mbias: (B, 1, S) f32 additive bias -> (B, S, H) bf16."""
    B, S, H3 = qkv.shape
    H = H3 // 3
    tq = min(block_q, S)
    grid = (B, pl.cdiv(S, tq))
    return pl.pallas_call(
        functools.partial(_attention_kernel, num_heads=num_heads, head_dim=head_dim),
        out_shape=jax.ShapeDtypeStruct((B, S, H), qkv.dtype),
        grid=grid,
        in_specs=[
            pl.BlockSpec((1, tq, H), lambda b, qi: (b, qi, 0)),   # Q rows: streamed
            pl.BlockSpec((1, S, H), lambda b, qi: (b, 0, 1)),     # K: resident per batch
            pl.BlockSpec((1, S, H), lambda b, qi: (b, 0, 2)),     # V: resident per batch
            pl.BlockSpec((1, 1, S), lambda b, qi: (b, 0, 0)),     # mask bias
        ],
        out_specs=pl.BlockSpec((1, tq, H), lambda b, qi: (b, qi, 0)),
        compiler_params=pltpu.CompilerParams(
            dimension_semantics=("parallel", "parallel"),
            vmem_limit_bytes=VMEM_LIMIT),
    )(qkv, qkv, qkv, mbias)


# ----------------------------------------------------------------------------
# DistilBertWrapper forward (plain-JAX glue orchestrating the Pallas kernels)
# ----------------------------------------------------------------------------
def distilbert_wrapper_forward(params, input_ids, attention_mask, inputs_embeds, cfg):
    B, S = attention_mask.shape
    H, NH = cfg["hidden"], cfg["heads"]
    DH = H // NH
    n_layers = len(params["layers"])

    # --- embeddings (table gather is XLA glue; LayerNorm + f32->bf16 cast in-kernel) ---
    if inputs_embeds is None:
        inputs_embeds = params["word_emb"][input_ids]                 # (B, S, H) f32
    x = inputs_embeds + params["pos_emb"][jnp.arange(S)][None, :, :]
    x = layernorm(x.reshape(B * S, H), params["emb_ln_g"], params["emb_ln_b"],
                  out_dtype=ACT_DTYPE)
    # TODO(synk): embedding dropout is identity (eval mode)

    # additive attention-mask bias shared across heads: (B, 1, S)
    mbias = ((1.0 - attention_mask.astype(jnp.float32)) * -1e9)[:, None, :]

    for li, p in enumerate(params["layers"]):
        # fused Q|K|V projection: one kernel, x read from HBM once, (H, 3H) weight;
        # the Q slice of qkv_w/qkv_b carries the folded 1/sqrt(head_dim) scale.
        qkv = linear(x, p["qkv_w"], p["qkv_b"])                       # (B*S, 3H)
        ctx = attention(qkv.reshape(B, S, 3 * H), mbias, NH, DH)      # (B, S, H)
        attn_out = linear(ctx.reshape(B * S, H), p["ao_w"], p["ao_b"])
        # TODO(synk): attention dropout is identity (eval mode)
        x = layernorm(attn_out, p["ln1_g"], p["ln1_b"], residual=x)   # fused residual

        inter = linear(x, p["ff1_w"], p["ff1_b"], activation="gelu")
        ff_out = linear(inter, p["ff2_w"], p["ff2_b"])
        # TODO(synk): FFN dropout is identity (eval mode)
        last = li == n_layers - 1
        x = layernorm(ff_out, p["ln2_g"], p["ln2_b"], residual=x,     # fused residual;
                      out_dtype=jnp.float32 if last else ACT_DTYPE)   # f32 cast fused

    output = x.reshape(B, S, H)                   # last_hidden_state == encoder(...)[0]
    pooled_output = output[:, 0]                  # DistilBertWrapper: output[:, 0]
    return output, pooled_output


# ----------------------------------------------------------------------------
# Parameter helpers
# ----------------------------------------------------------------------------
def fold_attention_scale(params, cfg):
    """Fold 1/sqrt(head_dim) into the Q slice of the fused QKV weights/bias (host-side, once)."""
    H = cfg["hidden"]
    scale = 1.0 / float(cfg["hidden"] // cfg["heads"]) ** 0.5
    new_layers = []
    for p in params["layers"]:
        p = dict(p)
        qkv_w, qkv_b = p["qkv_w"], p["qkv_b"]
        p["qkv_w"] = jnp.concatenate(
            [(qkv_w[:, :H].astype(jnp.float32) * scale).astype(qkv_w.dtype),
             qkv_w[:, H:]], axis=1)
        p["qkv_b"] = jnp.concatenate([qkv_b[:H] * scale, qkv_b[H:]], axis=0)
        new_layers.append(p)
    out = dict(params)
    out["layers"] = new_layers
    return out


def init_params(key, vocab, max_pos, H, NH, inter, n_layers):
    keys = iter(jax.random.split(key, 16 + 8 * n_layers))

    def dense(din, dout):
        w = (jax.random.normal(next(keys), (din, dout), jnp.float32) * 0.02).astype(ACT_DTYPE)
        return w, jnp.zeros((dout,), jnp.float32)

    params = {
        "word_emb": jax.random.normal(next(keys), (vocab, H), jnp.float32) * 0.02,
        "pos_emb": jax.random.normal(next(keys), (max_pos, H), jnp.float32) * 0.02,
        "emb_ln_g": jnp.ones((H,), jnp.float32),
        "emb_ln_b": jnp.zeros((H,), jnp.float32),
        "layers": [],
    }
    for _ in range(n_layers):
        qkv_w, qkv_b = dense(H, 3 * H)
        ao_w, ao_b = dense(H, H)
        ff1_w, ff1_b = dense(H, inter)
        ff2_w, ff2_b = dense(inter, H)
        params["layers"].append({
            "qkv_w": qkv_w, "qkv_b": qkv_b, "ao_w": ao_w, "ao_b": ao_b,
            "ln1_g": jnp.ones((H,), jnp.float32), "ln1_b": jnp.zeros((H,), jnp.float32),
            "ff1_w": ff1_w, "ff1_b": ff1_b, "ff2_w": ff2_w, "ff2_b": ff2_b,
            "ln2_g": jnp.ones((H,), jnp.float32), "ln2_b": jnp.zeros((H,), jnp.float32),
        })
    return params


# ----------------------------------------------------------------------------
if __name__ == "__main__":
    # hidden=128 keeps every lane dimension a multiple of 128 (two heads of dim 64),
    # while staying small; B*S = 16 matches the 16-row bf16 tile granularity.
    cfg = {"hidden": 128, "heads": 2, "inter": 256, "layers": 2,
           "vocab": 50, "max_pos": 16}
    B, S = 2, 8

    key = jax.random.PRNGKey(0)
    pkey, ikey = jax.random.split(key)
    params = init_params(pkey, cfg["vocab"], cfg["max_pos"], cfg["hidden"],
                         cfg["heads"], cfg["inter"], cfg["layers"])
    params = fold_attention_scale(params, cfg)     # one-time host-side Q-scale fold

    input_ids = jax.random.randint(ikey, (B, S), 0, cfg["vocab"], dtype=jnp.int32)
    attention_mask = jnp.ones((B, S), jnp.float32).at[1, 6:].set(0.0)  # some padding

    fwd = jax.jit(functools.partial(distilbert_wrapper_forward, cfg=cfg))
    output, pooled = fwd(params, input_ids, attention_mask, None)
    jax.block_until_ready((output, pooled))

    assert output.shape == (B, S, cfg["hidden"])
    assert pooled.shape == (B, cfg["hidden"])
    assert output.dtype == jnp.float32
    assert bool(jnp.isfinite(output).all())
    print("KERNEL_OK")
</pallas_src>

<mosaic_0001>
module attributes {stable_mosaic.version = 11 : i64} {
  func.func @_layernorm_kernel(%arg0: i32, %arg1: memref<16x128xf32, #tpu.memory_space<vmem>>, %arg2: memref<1x128xf32, #tpu.memory_space<vmem>>, %arg3: memref<1x128xf32, #tpu.memory_space<vmem>>, %arg4: memref<16x128xbf16, #tpu.memory_space<vmem>>) attributes {dimension_semantics = [#tpu.dimension_semantics<parallel>], iteration_bounds = array<i64: 1>, scalar_prefetch = 0 : i64, scratch_operands = 0 : i64, tpu.core_type = #tpu.core_type<tc>, window_params = [{transform_indices = @transform_0, window_bounds = array<i64: 16, 128>}, {pipeline_mode = #tpu.pipeline_mode<synchronous>, transform_indices = @transform_1, window_bounds = array<i64: 1, 128>}, {pipeline_mode = #tpu.pipeline_mode<synchronous>, transform_indices = @transform_2, window_bounds = array<i64: 1, 128>}, {transform_indices = @transform_3, window_bounds = array<i64: 16, 128>}]} {
    %c0 = arith.constant 0 : index
    %c0_0 = arith.constant 0 : index
    %0 = vector.load %arg1[%c0, %c0_0] : memref<16x128xf32, #tpu.memory_space<vmem>>, vector<16x128xf32>
    %cst = arith.constant dense<0.000000e+00> : vector<16xf32>
    %1 = vector.multi_reduction <add>, %0, %cst [1] : vector<16x128xf32> to vector<16xf32>
    %2 = vector.shape_cast %1 : vector<16xf32> to vector<16x1xf32>
    %cst_1 = arith.constant 1.280000e+02 : f32
    %3 = vector.broadcast %cst_1 : f32 to vector<16x1xf32>
    %4 = arith.divf %2, %3 : vector<16x1xf32>
    %5 = vector.broadcast %4 : vector<16x1xf32> to vector<16x128xf32>
    %6 = arith.subf %0, %5 : vector<16x128xf32>
    %7 = arith.mulf %6, %6 : vector<16x128xf32>
    %cst_2 = arith.constant dense<0.000000e+00> : vector<16xf32>
    %8 = vector.multi_reduction <add>, %7, %cst_2 [1] : vector<16x128xf32> to vector<16xf32>
    %9 = vector.shape_cast %8 : vector<16xf32> to vector<16x1xf32>
    %cst_3 = arith.constant 1.280000e+02 : f32
    %10 = vector.broadcast %cst_3 : f32 to vector<16x1xf32>
    %11 = arith.divf %9, %10 : vector<16x1xf32>
    %12 = vector.broadcast %4 : vector<16x1xf32> to vector<16x128xf32>
    %13 = arith.subf %0, %12 : vector<16x128xf32>
    %cst_4 = arith.constant 9.99999996E-13 : f32
    %14 = vector.broadcast %cst_4 : f32 to vector<16x1xf32>
    %15 = arith.addf %11, %14 : vector<16x1xf32>
    %16 = math.rsqrt %15 : vector<16x1xf32>
    %17 = vector.broadcast %16 : vector<16x1xf32> to vector<16x128xf32>
    %18 = arith.mulf %13, %17 : vector<16x128xf32>
    %c0_5 = arith.constant 0 : index
    %c0_6 = arith.constant 0 : index
    %19 = vector.load %arg2[%c0_5, %c0_6] : memref<1x128xf32, #tpu.memory_space<vmem>>, vector<1x128xf32>
    %20 = vector.broadcast %19 : vector<1x128xf32> to vector<16x128xf32>
    %21 = arith.mulf %18, %20 : vector<16x128xf32>
    %c0_7 = arith.constant 0 : index
    %c0_8 = arith.constant 0 : index
    %22 = vector.load %arg3[%c0_7, %c0_8] : memref<1x128xf32, #tpu.memory_space<vmem>>, vector<1x128xf32>
    %23 = vector.broadcast %22 : vector<1x128xf32> to vector<16x128xf32>
    %24 = arith.addf %21, %23 : vector<16x128xf32>
    %25 = arith.truncf %24 : vector<16x128xf32> to vector<16x128xbf16>
    %c0_9 = arith.constant 0 : index
    %c0_10 = arith.constant 0 : index
    %26 = vector.load %arg4[%c0_9, %c0_10] : memref<16x128xbf16, #tpu.memory_space<vmem>>, vector<16x128xbf16>
    tpu.vector_store %arg4[%c0_9, %c0_10], %25 {strides = array<i32>} : memref<16x128xbf16, #tpu.memory_space<vmem>>, vector<16x128xbf16>,
    return
  }
  func.func @transform_0(%arg0: i32) -> (i32, i32) {
    %c0_i32 = arith.constant 0 : i32
    %c0_i32_0 = arith.constant 0 : i32
    return %arg0, %c0_i32 : i32, i32
  }
  func.func @transform_1(%arg0: i32) -> (i32, i32) {
    %c0_i32 = arith.constant 0 : i32
    %c0_i32_0 = arith.constant 0 : i32
    %c0_i32_1 = arith.constant 0 : i32
    return %c0_i32, %c0_i32_0 : i32, i32
  }
  func.func @transform_2(%arg0: i32) -> (i32, i32) {
    %c0_i32 = arith.constant 0 : i32
    %c0_i32_0 = arith.constant 0 : i32
    %c0_i32_1 = arith.constant 0 : i32
    return %c0_i32, %c0_i32_0 : i32, i32
  }
  func.func @transform_3(%arg0: i32) -> (i32, i32) {
    %c0_i32 = arith.constant 0 : i32
    %c0_i32_0 = arith.constant 0 : i32
    return %arg0, %c0_i32 : i32, i32
  }
}

module attributes {stable_mosaic.version = 11 : i64} {
  func.func @_linear_kernel(%arg0: i32, %arg1: memref<16x128xbf16, #tpu.memory_space<vmem>>, %arg2: memref<128x384xbf16, #tpu.memory_space<vmem>>, %arg3: memref<1x384xf32, #tpu.memory_space<vmem>>, %arg4: memref<16x384xbf16, #tpu.memory_space<vmem>>) attributes {dimension_semantics = [#tpu.dimension_semantics<parallel>], iteration_bounds = array<i64: 1>, scalar_prefetch = 0 : i64, scratch_operands = 0 : i64, tpu.core_type = #tpu.core_type<tc>, window_params = [{transform_indices = @transform_0, window_bounds = array<i64: 16, 128>}, {pipeline_mode = #tpu.pipeline_mode<synchronous>, transform_indices = @transform_1, window_bounds = array<i64: 128, 384>}, {pipeline_mode = #tpu.pipeline_mode<synchronous>, transform_indices = @transform_2, window_bounds = array<i64: 1, 384>}, {transform_indices = @transform_3, window_bounds = array<i64: 16, 384>}]} {
    %c0 = arith.constant 0 : index
    %c0_0 = arith.constant 0 : index
    %0 = vector.load %arg1[%c0, %c0_0] : memref<16x128xbf16, #tpu.memory_space<vmem>>, vector<16x128xbf16>
    %c0_1 = arith.constant 0 : index
    %c0_2 = arith.constant 0 : index
    %1 = vector.load %arg2[%c0_1, %c0_2] : memref<128x384xbf16, #tpu.memory_space<vmem>>, vector<128x384xbf16>
    %cst = arith.constant dense<0.000000e+00> : vector<16x384xf32>
    %2 = tpu.matmul %0, %1, %cst {dimension_numbers = #tpu.dot_dimension_numbers<[1], [0], [0], [1], [0, 0, 1, 1], [], []>} : vector<16x128xbf16>, vector<128x384xbf16>, vector<16x384xf32> -> vector<16x384xf32>
    %c0_3 = arith.constant 0 : index
    %c0_4 = arith.constant 0 : index
    %3 = vector.load %arg3[%c0_3, %c0_4] : memref<1x384xf32, #tpu.memory_space<vmem>>, vector<1x384xf32>
    %4 = vector.broadcast %3 : vector<1x384xf32> to vector<16x384xf32>
    %5 = arith.addf %2, %4 : vector<16x384xf32>
    %6 = arith.truncf %5 : vector<16x384xf32> to vector<16x384xbf16>
    %c0_5 = arith.constant 0 : index
    %c0_6 = arith.constant 0 : index
    %7 = vector.load %arg4[%c0_5, %c0_6] : memref<16x384xbf16, #tpu.memory_space<vmem>>, vector<16x384xbf16>
    tpu.vector_store %arg4[%c0_5, %c0_6], %6 {strides = array<i32>} : memref<16x384xbf16, #tpu.memory_space<vmem>>, vector<16x384xbf16>,
    return
  }
  func.func @transform_0(%arg0: i32) -> (i32, i32) {
    %c0_i32 = arith.constant 0 : i32
    %c0_i32_0 = arith.constant 0 : i32
    return %arg0, %c0_i32 : i32, i32
  }
  func.func @transform_1(%arg0: i32) -> (i32, i32) {
    %c0_i32 = arith.constant 0 : i32
    %c0_i32_0 = arith.constant 0 : i32
    %c0_i32_1 = arith.constant 0 : i32
    return %c0_i32, %c0_i32_0 : i32, i32
  }
  func.func @transform_2(%arg0: i32) -> (i32, i32) {
    %c0_i32 = arith.constant 0 : i32
    %c0_i32_0 = arith.constant 0 : i32
    %c0_i32_1 = arith.constant 0 : i32
    return %c0_i32, %c0_i32_0 : i32, i32
  }
  func.func @transform_3(%arg0: i32) -> (i32, i32) {
    %c0_i32 = arith.constant 0 : i32
    %c0_i32_0 = arith.constant 0 : i32
    return %arg0, %c0_i32 : i32, i32
  }
}

module attributes {stable_mosaic.version = 11 : i64} {
  func.func @_attention_kernel(%arg0: i32, %arg1: i32, %arg2: memref<1x8x128xbf16, #tpu.memory_space<vmem>>, %arg3: memref<1x8x128xbf16, #tpu.memory_space<vmem>>, %arg4: memref<1x8x128xbf16, #tpu.memory_space<vmem>>, %arg5: memref<1x1x8xf32, #tpu.memory_space<vmem>>, %arg6: memref<1x8x128xbf16, #tpu.memory_space<vmem>>) attributes {dimension_semantics = [#tpu.dimension_semantics<parallel>, #tpu.dimension_semantics<parallel>], iteration_bounds = array<i64: 2, 1>, scalar_prefetch = 0 : i64, scratch_operands = 0 : i64, tpu.core_type = #tpu.core_type<tc>, window_params = [{transform_indices = @transform_0, window_bounds = array<i64: 1, 8, 128>}, {transform_indices = @transform_1, window_bounds = array<i64: 1, 8, 128>}, {transform_indices = @transform_2, window_bounds = array<i64: 1, 8, 128>}, {transform_indices = @transform_3, window_bounds = array<i64: 1, 1, 8>}, {transform_indices = @transform_4, window_bounds = array<i64: 1, 8, 128>}]} {
    %c0 = arith.constant 0 : index
    %c0_0 = arith.constant 0 : index
    %c0_1 = arith.constant 0 : index
    %0 = vector.load %arg2[%c0, %c0_0, %c0_1] : memref<1x8x128xbf16, #tpu.memory_space<vmem>>, vector<1x8x128xbf16>
    %1 = vector.shape_cast %0 : vector<1x8x128xbf16> to vector<8x128xbf16>
    %c0_2 = arith.constant 0 : index
    %c0_3 = arith.constant 0 : index
    %c0_4 = arith.constant 0 : index
    %2 = vector.load %arg3[%c0_2, %c0_3, %c0_4] : memref<1x8x128xbf16, #tpu.memory_space<vmem>>, vector<1x8x128xbf16>
    %3 = vector.shape_cast %2 : vector<1x8x128xbf16> to vector<8x128xbf16>
    %c0_5 = arith.constant 0 : index
    %c0_6 = arith.constant 0 : index
    %c0_7 = arith.constant 0 : index
    %4 = vector.load %arg4[%c0_5, %c0_6, %c0_7] : memref<1x8x128xbf16, #tpu.memory_space<vmem>>, vector<1x8x128xbf16>
    %5 = vector.shape_cast %4 : vector<1x8x128xbf16> to vector<8x128xbf16>
    %c0_8 = arith.constant 0 : index
    %c0_9 = arith.constant 0 : index
    %c0_10 = arith.constant 0 : index
    %6 = vector.load %arg5[%c0_8, %c0_9, %c0_10] : memref<1x1x8xf32, #tpu.memory_space<vmem>>, vector<1x1x8xf32>
    %7 = vector.shape_cast %6 : vector<1x1x8xf32> to vector<1x8xf32>
    %8 = vector.extract_strided_slice %1 {offsets = [0, 0], sizes = [8, 64], strides = [1, 1]} : vector<8x128xbf16> to vector<8x64xbf16>
    %9 = vector.extract_strided_slice %3 {offsets = [0, 0], sizes = [8, 64], strides = [1, 1]} : vector<8x128xbf16> to vector<8x64xbf16>
    %10 = vector.extract_strided_slice %5 {offsets = [0, 0], sizes = [8, 64], strides = [1, 1]} : vector<8x128xbf16> to vector<8x64xbf16>
    %cst = arith.constant dense<0.000000e+00> : vector<8x8xf32>
    %11 = tpu.matmul %8, %9, %cst {dimension_numbers = #tpu.dot_dimension_numbers<[1], [1], [0], [0], [0, 0, 1, 0], [], []>} : vector<8x64xbf16>, vector<8x64xbf16>, vector<8x8xf32> -> vector<8x8xf32>
    %12 = vector.broadcast %7 : vector<1x8xf32> to vector<8x8xf32>
    %13 = arith.addf %11, %12 : vector<8x8xf32>
    %cst_11 = arith.constant dense<0xFF800000> : vector<8xf32>
    %14 = vector.multi_reduction <maximumf>, %13, %cst_11 [1] : vector<8x8xf32> to vector<8xf32>
    %15 = vector.shape_cast %14 : vector<8xf32> to vector<8x1xf32>
    %16 = vector.broadcast %15 : vector<8x1xf32> to vector<8x8xf32>
    %17 = arith.subf %13, %16 : vector<8x8xf32>
    %18 = math.exp %17 : vector<8x8xf32>
    %cst_12 = arith.constant dense<0.000000e+00> : vector<8xf32>
    %19 = vector.multi_reduction <add>, %18, %cst_12 [1] : vector<8x8xf32> to vector<8xf32>
    %20 = vector.shape_cast %19 : vector<8xf32> to vector<8x1xf32>
    %21 = arith.truncf %18 : vector<8x8xf32> to vector<8x8xbf16>
    %cst_13 = arith.constant dense<0.000000e+00> : vector<8x64xf32>
    %22 = tpu.matmul %21, %10, %cst_13 {dimension_numbers = #tpu.dot_dimension_numbers<[1], [0], [0], [1], [0, 0, 1, 1], [], []>} : vector<8x8xbf16>, vector<8x64xbf16>, vector<8x64xf32> -> vector<8x64xf32>
    %cst_14 = arith.constant 1.000000e+00 : f32
    %23 = vector.broadcast %cst_14 : f32 to vector<8x1xf32>
    %24 = arith.divf %23, %20 : vector<8x1xf32>
    %25 = vector.broadcast %24 : vector<8x1xf32> to vector<8x64xf32>
    %26 = arith.mulf %22, %25 : vector<8x64xf32>
    %27 = vector.extract_strided_slice %1 {offsets = [0, 64], sizes = [8, 64], strides = [1, 1]} : vector<8x128xbf16> to vector<8x64xbf16>
    %28 = vector.extract_strided_slice %3 {offsets = [0, 64], sizes = [8, 64], strides = [1, 1]} : vector<8x128xbf16> to vector<8x64xbf16>
    %29 = vector.extract_strided_slice %5 {offsets = [0, 64], sizes = [8, 64], strides = [1, 1]} : vector<8x128xbf16> to vector<8x64xbf16>
    %cst_15 = arith.constant dense<0.000000e+00> : vector<8x8xf32>
    %30 = tpu.matmul %27, %28, %cst_15 {dimension_numbers = #tpu.dot_dimension_numbers<[1], [1], [0], [0], [0, 0, 1, 0], [], []>} : vector<8x64xbf16>, vector<8x64xbf16>, vector<8x8xf32> -> vector<8x8xf32>
    %31 = vector.broadcast %7 : vector<1x8xf32> to vector<8x8xf32>
    %32 = arith.addf %30, %31 : vector<8x8xf32>
    %cst_16 = arith.constant dense<0xFF800000> : vector<8xf32>
    %33 = vector.multi_reduction <maximumf>, %32, %cst_16 [1] : vector<8x8xf32> to vector<8xf32>
    %34 = vector.shape_cast %33 : vector<8xf32> to vector<8x1xf32>
    %35 = vector.broadcast %34 : vector<8x1xf32> to vector<8x8xf32>
    %36 = arith.subf %32, %35 : vector<8x8xf32>
    %37 = math.exp %36 : vector<8x8xf32>
    %cst_17 = arith.constant dense<0.000000e+00> : vector<8xf32>
    %38 = vector.multi_reduction <add>, %37, %cst_17 [1] : vector<8x8xf32> to vector<8xf32>
    %39 = vector.shape_cast %38 : vector<8xf32> to vector<8x1xf32>
    %40 = arith.truncf %37 : vector<8x8xf32> to vector<8x8xbf16>
    %cst_18 = arith.constant dense<0.000000e+00> : vector<8x64xf32>
    %41 = tpu.matmul %40, %29, %cst_18 {dimension_numbers = #tpu.dot_dimension_numbers<[1], [0], [0], [1], [0, 0, 1, 1], [], []>} : vector<8x8xbf16>, vector<8x64xbf16>, vector<8x64xf32> -> vector<8x64xf32>
    %cst_19 = arith.constant 1.000000e+00 : f32
    %42 = vector.broadcast %cst_19 : f32 to vector<8x1xf32>
    %43 = arith.divf %42, %39 : vector<8x1xf32>
    %44 = vector.broadcast %43 : vector<8x1xf32> to vector<8x64xf32>
    %45 = arith.mulf %41, %44 : vector<8x64xf32>
    %46 = tpu.concatenate %26, %45 in 1 : vector<8x64xf32>, vector<8x64xf32> -> vector<8x128xf32>
    %47 = arith.truncf %46 : vector<8x128xf32> to vector<8x128xbf16>
    %c0_20 = arith.constant 0 : index
    %c0_21 = arith.constant 0 : index
    %c0_22 = arith.constant 0 : index
    %48 = vector.load %arg6[%c0_20, %c0_21, %c0_22] : memref<1x8x128xbf16, #tpu.memory_space<vmem>>, vector<1x8x128xbf16>
    %49 = vector.shape_cast %48 : vector<1x8x128xbf16> to vector<8x128xbf16>
    %50 = vector.shape_cast %47 : vector<8x128xbf16> to vector<1x8x128xbf16>
    tpu.vector_store %arg6[%c0_20, %c0_21, %c0_22], %50 {strides = array<i32>} : memref<1x8x128xbf16, #tpu.memory_space<vmem>>, vector<1x8x128xbf16>,
    return
  }
  func.func @transform_0(%arg0: i32, %arg1: i32) -> (i32, i32, i32) {
    %c0_i32 = arith.constant 0 : i32
    %c0_i32_0 = arith.constant 0 : i32
    return %arg0, %arg1, %c0_i32 : i32, i32, i32
  }
  func.func @transform_1(%arg0: i32, %arg1: i32) -> (i32, i32, i32) {
    %c0_i32 = arith.constant 0 : i32
    %c1_i32 = arith.constant 1 : i32
    %c0_i32_0 = arith.constant 0 : i32
    return %arg0, %c0_i32, %c1_i32 : i32, i32, i32
  }
  func.func @transform_2(%arg0: i32, %arg1: i32) -> (i32, i32, i32) {
    %c0_i32 = arith.constant 0 : i32
    %c2_i32 = arith.constant 2 : i32
    %c0_i32_0 = arith.constant 0 : i32
    return %arg0, %c0_i32, %c2_i32 : i32, i32, i32
  }
  func.func @transform_3(%arg0: i32, %arg1: i32) -> (i32, i32, i32) {
    %c0_i32 = arith.constant 0 : i32
    %c0_i32_0 = arith.constant 0 : i32
    %c0_i32_1 = arith.constant 0 : i32
    return %arg0, %c0_i32, %c0_i32_0 : i32, i32, i32
  }
  func.func @transform_4(%arg0: i32, %arg1: i32) -> (i32, i32, i32) {
    %c0_i32 = arith.constant 0 : i32
    %c0_i32_0 = arith.constant 0 : i32
    return %arg0, %arg1, %c0_i32 : i32, i32, i32
  }
}

module attributes {stable_mosaic.version = 11 : i64} {
  func.func @_linear_kernel(%arg0: i32, %arg1: memref<16x128xbf16, #tpu.memory_space<vmem>>, %arg2: memref<128x128xbf16, #tpu.memory_space<vmem>>, %arg3: memref<1x128xf32, #tpu.memory_space<vmem>>, %arg4: memref<16x128xbf16, #tpu.memory_space<vmem>>) attributes {dimension_semantics = [#tpu.dimension_semantics<parallel>], iteration_bounds = array<i64: 1>, scalar_prefetch = 0 : i64, scratch_operands = 0 : i64, tpu.core_type = #tpu.core_type<tc>, window_params = [{transform_indices = @transform_0, window_bounds = array<i64: 16, 128>}, {pipeline_mode = #tpu.pipeline_mode<synchronous>, transform_indices = @transform_1, window_bounds = array<i64: 128, 128>}, {pipeline_mode = #tpu.pipeline_mode<synchronous>, transform_indices = @transform_2, window_bounds = array<i64: 1, 128>}, {transform_indices = @transform_3, window_bounds = array<i64: 16, 128>}]} {
    %c0 = arith.constant 0 : index
    %c0_0 = arith.constant 0 : index
    %0 = vector.load %arg1[%c0, %c0_0] : memref<16x128xbf16, #tpu.memory_space<vmem>>, vector<16x128xbf16>
    %c0_1 = arith.constant 0 : index
    %c0_2 = arith.constant 0 : index
    %1 = vector.load %arg2[%c0_1, %c0_2] : memref<128x128xbf16, #tpu.memory_space<vmem>>, vector<128x128xbf16>
    %cst = arith.constant dense<0.000000e+00> : vector<16x128xf32>
    %2 = tpu.matmul %0, %1, %cst {dimension_numbers = #tpu.dot_dimension_numbers<[1], [0], [0], [1], [0, 0, 1, 1], [], []>} : vector<16x128xbf16>, vector<128x128xbf16>, vector<16x128xf32> -> vector<16x128xf32>
    %c0_3 = arith.constant 0 : index
    %c0_4 = arith.constant 0 : index
    %3 = vector.load %arg3[%c0_3, %c0_4] : memref<1x128xf32, #tpu.memory_space<vmem>>, vector<1x128xf32>
    %4 = vector.broadcast %3 : vector<1x128xf32> to vector<16x128xf32>
    %5 = arith.addf %2, %4 : vector<16x128xf32>
    %6 = arith.truncf %5 : vector<16x128xf32> to vector<16x128xbf16>
    %c0_5 = arith.constant 0 : index
    %c0_6 = arith.constant 0 : index
    %7 = vector.load %arg4[%c0_5, %c0_6] : memref<16x128xbf16, #tpu.memory_space<vmem>>, vector<16x128xbf16>
    tpu.vector_store %arg4[%c0_5, %c0_6], %6 {strides = array<i32>} : memref<16x128xbf16, #tpu.memory_space<vmem>>, vector<16x128xbf16>,
    return
  }
  func.func @transform_0(%arg0: i32) -> (i32, i32) {
    %c0_i32 = arith.constant 0 : i32
    %c0_i32_0 = arith.constant 0 : i32
    return %arg0, %c0_i32 : i32, i32
  }
  func.func @transform_1(%arg0: i32) -> (i32, i32) {
    %c0_i32 = arith.constant 0 : i32
    %c0_i32_0 = arith.constant 0 : i32
    %c0_i32_1 = arith.constant 0 : i32
    return %c0_i32, %c0_i32_0 : i32, i32
  }
  func.func @transform_2(%arg0: i32) -> (i32, i32) {
    %c0_i32 = arith.constant 0 : i32
    %c0_i32_0 = arith.constant 0 : i32
    %c0_i32_1 = arith.constant 0 : i32
    return %c0_i32, %c0_i32_0 : i32, i32
  }
  func.func @transform_3(%arg0: i32) -> (i32, i32) {
    %c0_i32 = arith.constant 0 : i32
    %c0_i32_0 = arith.constant 0 : i32
    return %arg0, %c0_i32 : i32, i32
  }
}

module attributes {stable_mosaic.version = 11 : i64} {
  func.func @_layernorm_kernel(%arg0: i32, %arg1: memref<16x128xbf16, #tpu.memory_space<vmem>>, %arg2: memref<16x128xbf16, #tpu.memory_space<vmem>>, %arg3: memref<1x128xf32, #tpu.memory_space<vmem>>, %arg4: memref<1x128xf32, #tpu.memory_space<vmem>>, %arg5: memref<16x128xbf16, #tpu.memory_space<vmem>>) attributes {dimension_semantics = [#tpu.dimension_semantics<parallel>], iteration_bounds = array<i64: 1>, scalar_prefetch = 0 : i64, scratch_operands = 0 : i64, tpu.core_type = #tpu.core_type<tc>, window_params = [{transform_indices = @transform_0, window_bounds = array<i64: 16, 128>}, {transform_indices = @transform_1, window_bounds = array<i64: 16, 128>}, {pipeline_mode = #tpu.pipeline_mode<synchronous>, transform_indices = @transform_2, window_bounds = array<i64: 1, 128>}, {pipeline_mode = #tpu.pipeline_mode<synchronous>, transform_indices = @transform_3, window_bounds = array<i64: 1, 128>}, {transform_indices = @transform_4, window_bounds = array<i64: 16, 128>}]} {
    %c0 = arith.constant 0 : index
    %c0_0 = arith.constant 0 : index
    %0 = vector.load %arg1[%c0, %c0_0] : memref<16x128xbf16, #tpu.memory_space<vmem>>, vector<16x128xbf16>
    %1 = arith.extf %0 : vector<16x128xbf16> to vector<16x128xf32>
    %c0_1 = arith.constant 0 : index
    %c0_2 = arith.constant 0 : index
    %2 = vector.load %arg2[%c0_1, %c0_2] : memref<16x128xbf16, #tpu.memory_space<vmem>>, vector<16x128xbf16>
    %3 = arith.extf %2 : vector<16x128xbf16> to vector<16x128xf32>
    %4 = arith.addf %1, %3 : vector<16x128xf32>
    %cst = arith.constant dense<0.000000e+00> : vector<16xf32>
    %5 = vector.multi_reduction <add>, %4, %cst [1] : vector<16x128xf32> to vector<16xf32>
    %6 = vector.shape_cast %5 : vector<16xf32> to vector<16x1xf32>
    %cst_3 = arith.constant 1.280000e+02 : f32
    %7 = vector.broadcast %cst_3 : f32 to vector<16x1xf32>
    %8 = arith.divf %6, %7 : vector<16x1xf32>
    %9 = vector.broadcast %8 : vector<16x1xf32> to vector<16x128xf32>
    %10 = arith.subf %4, %9 : vector<16x128xf32>
    %11 = arith.mulf %10, %10 : vector<16x128xf32>
    %cst_4 = arith.constant dense<0.000000e+00> : vector<16xf32>
    %12 = vector.multi_reduction <add>, %11, %cst_4 [1] : vector<16x128xf32> to vector<16xf32>
    %13 = vector.shape_cast %12 : vector<16xf32> to vector<16x1xf32>
    %cst_5 = arith.constant 1.280000e+02 : f32
    %14 = vector.broadcast %cst_5 : f32 to vector<16x1xf32>
    %15 = arith.divf %13, %14 : vector<16x1xf32>
    %16 = vector.broadcast %8 : vector<16x1xf32> to vector<16x128xf32>
    %17 = arith.subf %4, %16 : vector<16x128xf32>
    %cst_6 = arith.constant 9.99999996E-13 : f32
    %18 = vector.broadcast %cst_6 : f32 to vector<16x1xf32>
    %19 = arith.addf %15, %18 : vector<16x1xf32>
    %20 = math.rsqrt %19 : vector<16x1xf32>
    %21 = vector.broadcast %20 : vector<16x1xf32> to vector<16x128xf32>
    %22 = arith.mulf %17, %21 : vector<16x128xf32>
    %c0_7 = arith.constant 0 : index
    %c0_8 = arith.constant 0 : index
    %23 = vector.load %arg3[%c0_7, %c0_8] : memref<1x128xf32, #tpu.memory_space<vmem>>, vector<1x128xf32>
    %24 = vector.broadcast %23 : vector<1x128xf32> to vector<16x128xf32>
    %25 = arith.mulf %22, %24 : vector<16x128xf32>
    %c0_9 = arith.constant 0 : index
    %c0_10 = arith.constant 0 : index
    %26 = vector.load %arg4[%c0_9, %c0_10] : memref<1x128xf32, #tpu.memory_space<vmem>>, vector<1x128xf32>
    %27 = vector.broadcast %26 : vector<1x128xf32> to vector<16x128xf32>
    %28 = arith.addf %25, %27 : vector<16x128xf32>
    %29 = arith.truncf %28 : vector<16x128xf32> to vector<16x128xbf16>
    %c0_11 = arith.constant 0 : index
    %c0_12 = arith.constant 0 : index
    %30 = vector.load %arg5[%c0_11, %c0_12] : memref<16x128xbf16, #tpu.memory_space<vmem>>, vector<16x128xbf16>
    tpu.vector_store %arg5[%c0_11, %c0_12], %29 {strides = array<i32>} : memref<16x128xbf16, #tpu.memory_space<vmem>>, vector<16x128xbf16>,
    return
  }
  func.func @transform_0(%arg0: i32) -> (i32, i32) {
    %c0_i32 = arith.constant 0 : i32
    %c0_i32_0 = arith.constant 0 : i32
    return %arg0, %c0_i32 : i32, i32
  }
  func.func @transform_1(%arg0: i32) -> (i32, i32) {
    %c0_i32 = arith.constant 0 : i32
    %c0_i32_0 = arith.constant 0 : i32
    return %arg0, %c0_i32 : i32, i32
  }
  func.func @transform_2(%arg0: i32) -> (i32, i32) {
    %c0_i32 = arith.constant 0 : i32
    %c0_i32_0 = arith.constant 0 : i32
    %c0_i32_1 = arith.constant 0 : i32
    return %c0_i32, %c0_i32_0 : i32, i32
  }
  func.func @transform_3(%arg0: i32) -> (i32, i32) {
    %c0_i32 = arith.constant 0 : i32
    %c0_i32_0 = arith.constant 0 : i32
    %c0_i32_1 = arith.constant 0 : i32
    return %c0_i32, %c0_i32_0 : i32, i32
  }
  func.func @transform_4(%arg0: i32) -> (i32, i32) {
    %c0_i32 = arith.constant 0 : i32
    %c0_i32_0 = arith.constant 0 : i32
    return %arg0, %c0_i32 : i32, i32
  }
}

module attributes {stable_mosaic.version = 11 : i64} {
  func.func @_linear_kernel(%arg0: i32, %arg1: memref<16x256xbf16, #tpu.memory_space<vmem>>, %arg2: memref<256x128xbf16, #tpu.memory_space<vmem>>, %arg3: memref<1x128xf32, #tpu.memory_space<vmem>>, %arg4: memref<16x128xbf16, #tpu.memory_space<vmem>>) attributes {dimension_semantics = [#tpu.dimension_semantics<parallel>], iteration_bounds = array<i64: 1>, scalar_prefetch = 0 : i64, scratch_operands = 0 : i64, tpu.core_type = #tpu.core_type<tc>, window_params = [{transform_indices = @transform_0, window_bounds = array<i64: 16, 256>}, {pipeline_mode = #tpu.pipeline_mode<synchronous>, transform_indices = @transform_1, window_bounds = array<i64: 256, 128>}, {pipeline_mode = #tpu.pipeline_mode<synchronous>, transform_indices = @transform_2, window_bounds = array<i64: 1, 128>}, {transform_indices = @transform_3, window_bounds = array<i64: 16, 128>}]} {
    %c0 = arith.constant 0 : index
    %c0_0 = arith.constant 0 : index
    %0 = vector.load %arg1[%c0, %c0_0] : memref<16x256xbf16, #tpu.memory_space<vmem>>, vector<16x256xbf16>
    %c0_1 = arith.constant 0 : index
    %c0_2 = arith.constant 0 : index
    %1 = vector.load %arg2[%c0_1, %c0_2] : memref<256x128xbf16, #tpu.memory_space<vmem>>, vector<256x128xbf16>
    %cst = arith.constant dense<0.000000e+00> : vector<16x128xf32>
    %2 = tpu.matmul %0, %1, %cst {dimension_numbers = #tpu.dot_dimension_numbers<[1], [0], [0], [1], [0, 0, 1, 1], [], []>} : vector<16x256xbf16>, vector<256x128xbf16>, vector<16x128xf32> -> vector<16x128xf32>
    %c0_3 = arith.constant 0 : index
    %c0_4 = arith.constant 0 : index
    %3 = vector.load %arg3[%c0_3, %c0_4] : memref<1x128xf32, #tpu.memory_space<vmem>>, vector<1x128xf32>
    %4 = vector.broadcast %3 : vector<1x128xf32> to vector<16x128xf32>
    %5 = arith.addf %2, %4 : vector<16x128xf32>
    %6 = arith.truncf %5 : vector<16x128xf32> to vector<16x128xbf16>
    %c0_5 = arith.constant 0 : index
    %c0_6 = arith.constant 0 : index
    %7 = vector.load %arg4[%c0_5, %c0_6] : memref<16x128xbf16, #tpu.memory_space<vmem>>, vector<16x128xbf16>
    tpu.vector_store %arg4[%c0_5, %c0_6], %6 {strides = array<i32>} : memref<16x128xbf16, #tpu.memory_space<vmem>>, vector<16x128xbf16>,
    return
  }
  func.func @transform_0(%arg0: i32) -> (i32, i32) {
    %c0_i32 = arith.constant 0 : i32
    %c0_i32_0 = arith.constant 0 : i32
    return %arg0, %c0_i32 : i32, i32
  }
  func.func @transform_1(%arg0: i32) -> (i32, i32) {
    %c0_i32 = arith.constant 0 : i32
    %c0_i32_0 = arith.constant 0 : i32
    %c0_i32_1 = arith.constant 0 : i32
    return %c0_i32, %c0_i32_0 : i32, i32
  }
  func.func @transform_2(%arg0: i32) -> (i32, i32) {
    %c0_i32 = arith.constant 0 : i32
    %c0_i32_0 = arith.constant 0 : i32
    %c0_i32_1 = arith.constant 0 : i32
    return %c0_i32, %c0_i32_0 : i32, i32
  }
  func.func @transform_3(%arg0: i32) -> (i32, i32) {
    %c0_i32 = arith.constant 0 : i32
    %c0_i32_0 = arith.constant 0 : i32
    return %arg0, %c0_i32 : i32, i32
  }
}

module attributes {stable_mosaic.version = 11 : i64} {
  func.func @_layernorm_kernel(%arg0: i32, %arg1: memref<16x128xbf16, #tpu.memory_space<vmem>>, %arg2: memref<16x128xbf16, #tpu.memory_space<vmem>>, %arg3: memref<1x128xf32, #tpu.memory_space<vmem>>, %arg4: memref<1x128xf32, #tpu.memory_space<vmem>>, %arg5: memref<16x128xf32, #tpu.memory_space<vmem>>) attributes {dimension_semantics = [#tpu.dimension_semantics<parallel>], iteration_bounds = array<i64: 1>, scalar_prefetch = 0 : i64, scratch_operands = 0 : i64, tpu.core_type = #tpu.core_type<tc>, window_params = [{transform_indices = @transform_0, window_bounds = array<i64: 16, 128>}, {transform_indices = @transform_1, window_bounds = array<i64: 16, 128>}, {pipeline_mode = #tpu.pipeline_mode<synchronous>, transform_indices = @transform_2, window_bounds = array<i64: 1, 128>}, {pipeline_mode = #tpu.pipeline_mode<synchronous>, transform_indices = @transform_3, window_bounds = array<i64: 1, 128>}, {transform_indices = @transform_4, window_bounds = array<i64: 16, 128>}]} {
    %c0 = arith.constant 0 : index
    %c0_0 = arith.constant 0 : index
    %0 = vector.load %arg1[%c0, %c0_0] : memref<16x128xbf16, #tpu.memory_space<vmem>>, vector<16x128xbf16>
    %1 = arith.extf %0 : vector<16x128xbf16> to vector<16x128xf32>
    %c0_1 = arith.constant 0 : index
    %c0_2 = arith.constant 0 : index
    %2 = vector.load %arg2[%c0_1, %c0_2] : memref<16x128xbf16, #tpu.memory_space<vmem>>, vector<16x128xbf16>
    %3 = arith.extf %2 : vector<16x128xbf16> to vector<16x128xf32>
    %4 = arith.addf %1, %3 : vector<16x128xf32>
    %cst = arith.constant dense<0.000000e+00> : vector<16xf32>
    %5 = vector.multi_reduction <add>, %4, %cst [1] : vector<16x128xf32> to vector<16xf32>
    %6 = vector.shape_cast %5 : vector<16xf32> to vector<16x1xf32>
    %cst_3 = arith.constant 1.280000e+02 : f32
    %7 = vector.broadcast %cst_3 : f32 to vector<16x1xf32>
    %8 = arith.divf %6, %7 : vector<16x1xf32>
    %9 = vector.broadcast %8 : vector<16x1xf32> to vector<16x128xf32>
    %10 = arith.subf %4, %9 : vector<16x128xf32>
    %11 = arith.mulf %10, %10 : vector<16x128xf32>
    %cst_4 = arith.constant dense<0.000000e+00> : vector<16xf32>
    %12 = vector.multi_reduction <add>, %11, %cst_4 [1] : vector<16x128xf32> to vector<16xf32>
    %13 = vector.shape_cast %12 : vector<16xf32> to vector<16x1xf32>
    %cst_5 = arith.constant 1.280000e+02 : f32
    %14 = vector.broadcast %cst_5 : f32 to vector<16x1xf32>
    %15 = arith.divf %13, %14 : vector<16x1xf32>
    %16 = vector.broadcast %8 : vector<16x1xf32> to vector<16x128xf32>
    %17 = arith.subf %4, %16 : vector<16x128xf32>
    %cst_6 = arith.constant 9.99999996E-13 : f32
    %18 = vector.broadcast %cst_6 : f32 to vector<16x1xf32>
    %19 = arith.addf %15, %18 : vector<16x1xf32>
    %20 = math.rsqrt %19 : vector<16x1xf32>
    %21 = vector.broadcast %20 : vector<16x1xf32> to vector<16x128xf32>
    %22 = arith.mulf %17, %21 : vector<16x128xf32>
    %c0_7 = arith.constant 0 : index
    %c0_8 = arith.constant 0 : index
    %23 = vector.load %arg3[%c0_7, %c0_8] : memref<1x128xf32, #tpu.memory_space<vmem>>, vector<1x128xf32>
    %24 = vector.broadcast %23 : vector<1x128xf32> to vector<16x128xf32>
    %25 = arith.mulf %22, %24 : vector<16x128xf32>
    %c0_9 = arith.constant 0 : index
    %c0_10 = arith.constant 0 : index
    %26 = vector.load %arg4[%c0_9, %c0_10] : memref<1x128xf32, #tpu.memory_space<vmem>>, vector<1x128xf32>
    %27 = vector.broadcast %26 : vector<1x128xf32> to vector<16x128xf32>
    %28 = arith.addf %25, %27 : vector<16x128xf32>
    %c0_11 = arith.constant 0 : index
    %c0_12 = arith.constant 0 : index
    %29 = vector.load %arg5[%c0_11, %c0_12] : memref<16x128xf32, #tpu.memory_space<vmem>>, vector<16x128xf32>
    tpu.vector_store %arg5[%c0_11, %c0_12], %28 {strides = array<i32>} : memref<16x128xf32, #tpu.memory_space<vmem>>, vector<16x128xf32>,
    return
  }
  func.func @transform_0(%arg0: i32) -> (i32, i32) {
    %c0_i32 = arith.constant 0 : i32
    %c0_i32_0 = arith.constant 0 : i32
    return %arg0, %c0_i32 : i32, i32
  }
  func.func @transform_1(%arg0: i32) -> (i32, i32) {
    %c0_i32 = arith.constant 0 : i32
    %c0_i32_0 = arith.constant 0 : i32
    return %arg0, %c0_i32 : i32, i32
  }
  func.func @transform_2(%arg0: i32) -> (i32, i32) {
    %c0_i32 = arith.constant 0 : i32
    %c0_i32_0 = arith.constant 0 : i32
    %c0_i32_1 = arith.constant 0 : i32
    return %c0_i32, %c0_i32_0 : i32, i32
  }
  func.func @transform_3(%arg0: i32) -> (i32, i32) {
    %c0_i32 = arith.constant 0 : i32
    %c0_i32_0 = arith.constant 0 : i32
    %c0_i32_1 = arith.constant 0 : i32
    return %c0_i32, %c0_i32_0 : i32, i32
  }
  func.func @transform_4(%arg0: i32) -> (i32, i32) {
    %c0_i32 = arith.constant 0 : i32
    %c0_i32_0 = arith.constant 0 : i32
    return %arg0, %c0_i32 : i32, i32
  }
}

module attributes {stable_mosaic.version = 11 : i64} {
  func.func @_linear_kernel(%arg0: i32, %arg1: memref<16x128xbf16, #tpu.memory_space<vmem>>, %arg2: memref<128x256xbf16, #tpu.memory_space<vmem>>, %arg3: memref<1x256xf32, #tpu.memory_space<vmem>>, %arg4: memref<16x256xbf16, #tpu.memory_space<vmem>>) attributes {dimension_semantics = [#tpu.dimension_semantics<parallel>], iteration_bounds = array<i64: 1>, scalar_prefetch = 0 : i64, scratch_operands = 0 : i64, tpu.core_type = #tpu.core_type<tc>, window_params = [{transform_indices = @transform_0, window_bounds = array<i64: 16, 128>}, {pipeline_mode = #tpu.pipeline_mode<synchronous>, transform_indices = @transform_1, window_bounds = array<i64: 128, 256>}, {pipeline_mode = #tpu.pipeline_mode<synchronous>, transform_indices = @transform_2, window_bounds = array<i64: 1, 256>}, {transform_indices = @transform_3, window_bounds = array<i64: 16, 256>}]} {
    %c0 = arith.constant 0 : index
    %c0_0 = arith.constant 0 : index
    %0 = vector.load %arg1[%c0, %c0_0] : memref<16x128xbf16, #tpu.memory_space<vmem>>, vector<16x128xbf16>
    %c0_1 = arith.constant 0 : index
    %c0_2 = arith.constant 0 : index
    %1 = vector.load %arg2[%c0_1, %c0_2] : memref<128x256xbf16, #tpu.memory_space<vmem>>, vector<128x256xbf16>
    %cst = arith.constant dense<0.000000e+00> : vector<16x256xf32>
    %2 = tpu.matmul %0, %1, %cst {dimension_numbers = #tpu.dot_dimension_numbers<[1], [0], [0], [1], [0, 0, 1, 1], [], []>} : vector<16x128xbf16>, vector<128x256xbf16>, vector<16x256xf32> -> vector<16x256xf32>
    %c0_3 = arith.constant 0 : index
    %c0_4 = arith.constant 0 : index
    %3 = vector.load %arg3[%c0_3, %c0_4] : memref<1x256xf32, #tpu.memory_space<vmem>>, vector<1x256xf32>
    %4 = vector.broadcast %3 : vector<1x256xf32> to vector<16x256xf32>
    %5 = arith.addf %2, %4 : vector<16x256xf32>
    %cst_5 = arith.constant -1.702000e+00 : f32
    %6 = vector.broadcast %cst_5 : f32 to vector<16x256xf32>
    %7 = arith.mulf %6, %5 : vector<16x256xf32>
    %8 = math.exp %7 : vector<16x256xf32>
    %cst_6 = arith.constant 1.000000e+00 : f32
    %9 = vector.broadcast %cst_6 : f32 to vector<16x256xf32>
    %10 = arith.addf %9, %8 : vector<16x256xf32>
    %11 = tpu.reciprocal %10 {approx = true} : vector<16x256xf32> -> vector<16x256xf32>
    %12 = arith.mulf %5, %11 : vector<16x256xf32>
    %13 = arith.truncf %12 : vector<16x256xf32> to vector<16x256xbf16>
    %c0_7 = arith.constant 0 : index
    %c0_8 = arith.constant 0 : index
    %14 = vector.load %arg4[%c0_7, %c0_8] : memref<16x256xbf16, #tpu.memory_space<vmem>>, vector<16x256xbf16>
    tpu.vector_store %arg4[%c0_7, %c0_8], %13 {strides = array<i32>} : memref<16x256xbf16, #tpu.memory_space<vmem>>, vector<16x256xbf16>,
    return
  }
  func.func @transform_0(%arg0: i32) -> (i32, i32) {
    %c0_i32 = arith.constant 0 : i32
    %c0_i32_0 = arith.constant 0 : i32
    return %arg0, %c0_i32 : i32, i32
  }
  func.func @transform_1(%arg0: i32) -> (i32, i32) {
    %c0_i32 = arith.constant 0 : i32
    %c0_i32_0 = arith.constant 0 : i32
    %c0_i32_1 = arith.constant 0 : i32
    return %c0_i32, %c0_i32_0 : i32, i32
  }
  func.func @transform_2(%arg0: i32) -> (i32, i32) {
    %c0_i32 = arith.constant 0 : i32
    %c0_i32_0 = arith.constant 0 : i32
    %c0_i32_1 = arith.constant 0 : i32
    return %c0_i32, %c0_i32_0 : i32, i32
  }
  func.func @transform_3(%arg0: i32) -> (i32, i32) {
    %c0_i32 = arith.constant 0 : i32
    %c0_i32_0 = arith.constant 0 : i32
    return %arg0, %c0_i32 : i32, i32
  }
}

</mosaic_0001>

<llo_original>
// kernel: distilbert_wrapper_forward.15
$region0: #{distilbert_wrapper_forward.15}
  #allocation0 [shape = 'u32[]', space=smem, size = 0x4, offset = 0x4, fixed_abs, tag = 'smem constant byte address 0x4 - core index']
  #allocation1 [shape = 'u32[144,128]{1,0:T(1,128)}', space=vmem, size = 0x12000, scoped, tag = 'internal scratch']
  %s0 = inlined_call_operand.vmem [shape: f32[16,128], index: 0, kind: input, shape index: {}]
  %s1 = inlined_call_operand.vmem [shape: f32[1,128], index: 1, kind: input, shape index: {}]
  %s2 = inlined_call_operand.vmem [shape: f32[1,128], index: 2, kind: input, shape index: {}]
  %s3 = inlined_call_operand.vmem [shape: bf16[16,128], index: 3, kind: output, shape index: {}]
  %s4 = sld [smem:[#allocation0]]
  $region22: #{distilbert_wrapper_forward.15} parent=0
    _
  %s6 = ssub.s32 1, %s4
  %s7 = scalar_select 0, %s6, %s4
  // Predicated region
  $region2: #{distilbert_wrapper_forward.15} parent=0 // pred_check
    _
  $region3: #{distilbert_wrapper_forward.15} parent=0 // pred_check_branch
    %9 = sbr.rel (0) target = $region5
  $region4: #{distilbert_wrapper_forward.15} parent=0 // pred_region
    _
  $region5: #{distilbert_wrapper_forward.15} parent=0 // pred_fallthru
    _
  // Predicated region
  $region6: #{distilbert_wrapper_forward.15} parent=0 // pred_check
    _
  $region7: #{distilbert_wrapper_forward.15} parent=0 // pred_check_branch
    %11 = sbr.rel (0) target = $region9
  $region8: #{distilbert_wrapper_forward.15} parent=0 // pred_region
    _
  $region9: #{distilbert_wrapper_forward.15} parent=0 // pred_fallthru
    _
  // Predicated region
  $region10: #{distilbert_wrapper_forward.15} parent=0 // pred_check
    _
  $region11: #{distilbert_wrapper_forward.15} parent=0 // pred_check_branch
    %13 = sbr.rel (0) target = $region13
  $region12: #{distilbert_wrapper_forward.15} parent=0 // pred_region
    _
  $region13: #{distilbert_wrapper_forward.15} parent=0 // pred_fallthru
    _
  %v14 = vld [vmem:[%s0] sm:$0xff]
  %v15 = vld [vmem:[%s0 + $0x8] sm:$0xff]
  %16 = vadd.xlane.f32.xlu0 %v14
  %v17 = vpop.xlane.xlu0 %16
  %18 = vadd.xlane.f32.xlu0 %v15
  %v19 = vpop.xlane.xlu0 %18
  %v20 = vrcp.pop 128.0
  %v21 = vmul.f32 %v17, %v20
  %v22 = vmul.f32 %v19, %v20
  %v23 = vsub.f32 %v14, %v21
  %v24 = vsub.f32 %v15, %v22
  %v25 = vmul.f32 %v23, %v23
  %v26 = vmul.f32 %v24, %v24
  %27 = vadd.xlane.f32.xlu0 %v25
  %v28 = vpop.xlane.xlu0 %27
  %29 = vadd.xlane.f32.xlu0 %v26
  %v30 = vpop.xlane.xlu0 %29
  %v31 = vmul.f32 %v28, %v20
  %v32 = vmul.f32 %v30, %v20
  %v33 = vadd.f32 %v31, 1e-12
  %v34 = vadd.f32 %v32, 1e-12
  %v35 = vrsqrt.pop %v33
  %v36 = vrsqrt.pop %v34
  %v37 = vmul.f32 %v23, %v35
  %v38 = vmul.f32 %v24, %v36
  %v39 = vld [vmem:[%s1] sm:$0x1]
  %v41 = vlaneseq
  %v42 = vshrl.u32 %v41, 7
  %v43 = vsub.s32 0, %v42
  %v44 = vrot.slane %v39, %v43
  %v46 = vmul.f32 %v37, %v44
  %v47 = vmul.f32 %v38, %v44
  %v48 = vld [vmem:[%s2] sm:$0x1]
  %v50 = vlaneseq
  %v51 = vshrl.u32 %v50, 7
  %v52 = vsub.s32 0, %v51
  %v53 = vrot.slane %v48, %v52
  %v55 = vadd.f32 %v46, %v53
  %v56 = vadd.f32 %v47, %v53
  %v57 = vpack.c.bf16 %v56, %v55
  %v59 = vunpack.c.l.b16 %v57
  %v60 = vunpack.c.h.b16 %v57
  %v61 = vpack.c.b16 %v59, %v59
  %v62 = vpack.c.b16 %v60, %v60
  %65 = vst [vmem:[%s3] sm:$0xf] %v61
  %66 = vst [vmem:[%s3 + $0x4] sm:$0xf] %v62
  // Predicated region
  $region14: #{distilbert_wrapper_forward.15} parent=0 // pred_check
    _
  $region15: #{distilbert_wrapper_forward.15} parent=0 // pred_check_branch
    %68 = sbr.rel (0) target = $region17
  $region16: #{distilbert_wrapper_forward.15} parent=0 // pred_region
    _
  $region17: #{distilbert_wrapper_forward.15} parent=0 // pred_fallthru
    _
  // Predicated region
  $region18: #{distilbert_wrapper_forward.15} parent=0 // pred_check
    _
  $region19: #{distilbert_wrapper_forward.15} parent=0 // pred_check_branch
    %70 = sbr.rel (0) target = $region21
  $region20: #{distilbert_wrapper_forward.15} parent=0 // pred_region
    _
  $region21: #{distilbert_wrapper_forward.15} parent=0 // pred_fallthru
    _

// kernel: distilbert_wrapper_forward.17
$region0: #{distilbert_wrapper_forward.17}
  #allocation0 [shape = 'u32[]', space=smem, size = 0x4, offset = 0x4, fixed_abs, tag = 'smem constant byte address 0x4 - core index']
  #allocation1 [shape = 'u32[144,128]{1,0:T(1,128)}', space=vmem, size = 0x12000, scoped, tag = 'internal scratch']
  %s0 = inlined_call_operand.vmem [shape: bf16[2,8,384], index: 0, kind: input, shape index: {}, may-alias: {0,1,2}]
  %s1 = inlined_call_operand.vmem [shape: bf16[2,8,384], index: 1, kind: input, shape index: {}, may-alias: {0,1,2}]
  %s2 = inlined_call_operand.vmem [shape: bf16[2,8,384], index: 2, kind: input, shape index: {}, may-alias: {0,1,2}]
  %s3 = inlined_call_operand.vmem [shape: f32[2,1,8], index: 3, kind: input, shape index: {}]
  %s4 = inlined_call_operand.vmem [shape: bf16[2,8,128], index: 4, kind: output, shape index: {}]
  %s5 = sld [smem:[#allocation0]]
  $region49: #{distilbert_wrapper_forward.17} parent=0
    _
  %s7 = ssub.s32 1, %s5
  %s8 = scalar_select 0, %s7, %s5
  loop: start=0, step=1, limit=4
  $region2: #{distilbert_wrapper_forward.17} parent=0 // loop_pre_header
    _
  $region3: #{distilbert_wrapper_forward.17} parent=0 // loop_header
    %s10 = sphi 0, %s14
    %p11 = scmp.ge.s32.totalorder %s10, 4
    %s17 = sphi 0, %s29
    %s18 = sphi 0, %s25
    %s19 = sphi 0, %s17
    %s20 = sphi 0, %s18
    %s21 = sphi 0, %s19
    %s22 = sphi 0, %s20
    %s34 = sphi 0, %s36
    %s37 = sphi 0, %s34
    %s38 = sphi 0, %s37
    %s54 = sphi 0, %s38
    %s60 = sphi 0, %s62
    %s63 = sphi 0, %s60
    %s64 = sphi 0, %s63
    %s80 = sphi 0, %s64
    %s86 = sphi 0, %s88
    %s89 = sphi 0, %s86
    %s90 = sphi 0, %s89
    %s106 = sphi 0, %s90
    %s112 = sphi 0, %s114
    %s115 = sphi 0, %s112
    %s116 = sphi 0, %s115
    %s132 = sphi 0, %s116
    %s140 = sphi 0, %s142
    %s143 = sphi 0, %s140
    %s144 = sphi 0, %s143
    %s160 = sphi 0, %s144
  $region4: #{distilbert_wrapper_forward.17} parent=0 // loop_header_branch
    %13 = sbr.rel (%p11) target = $region8
  $region5: #{distilbert_wrapper_forward.17} parent=0 // loop_body
    %s15 = ssub.s32 %s10, 1
    %s16 = ssub.s32 %s10, 2
    %s23 = sadd.s32 1, %s18
    %p24 = scmp.ge.s32.totalorder %s23, 1
    %s25 = scalar_select %p24, 0, %s23
    %s26 = sadd.s32 1, %s17
    %s27 = scalar_select %p24, %s26, %s17
    %p28 = scmp.ge.s32.totalorder %s27, 2
    %s29 = scalar_select %p28, 0, %s27
    %s30 = ssub.s32 %s17, %s29
    %s31 = ssub.s32 %s18, %s25
    %s32 = sor.u32 %s30, %s31
    %p33 = scmp.eq.s32.totalorder %s32, 0
    %s35 = sadd.s32 %s34, 1
    %s36 = scalar_select %p33, %s34, %s35
    %p39 = pneg %p33
    %p40 = scmp.eq.s32.totalorder %s10, 1
    %p41 = por %p39, %p40
    %p42 = scmp.ne.s32.totalorder %s34, %s37
    %p43 = scmp.eq.s32.totalorder %s10, 0
    %p44 = por %p42, %p43
    %p45 = scmp.ne.s32.totalorder %s34, %s37
    %p46 = scmp.eq.s32.totalorder %s15, 1
    %p47 = por %p45, %p46
    %p48 = scmp.ne.s32.totalorder %s37, %s38
    %p49 = scmp.eq.s32.totalorder %s15, 0
    %p50 = por %p48, %p49
    %p51 = scmp.ne.s32.totalorder %s37, %s38
    %p52 = scmp.eq.s32.totalorder %s16, 1
    %p53 = por %p51, %p52
    %p55 = scmp.ne.s32.totalorder %s38, %s54
    %p56 = scmp.eq.s32.totalorder %s16, 0
    %p57 = por %p55, %p56
    %s58 = ssub.s32 %s17, %s29
    %p59 = scmp.eq.s32.totalorder %s58, 0
    %s61 = sadd.s32 %s60, 1
    %s62 = scalar_select %p59, %s60, %s61
    %p65 = pneg %p59
    %p66 = scmp.eq.s32.totalorder %s10, 1
    %p67 = por %p65, %p66
    %p68 = scmp.ne.s32.totalorder %s60, %s63
    %p69 = scmp.eq.s32.totalorder %s10, 0
    %p70 = por %p68, %p69
    %p71 = scmp.ne.s32.totalorder %s60, %s63
    %p72 = scmp.eq.s32.totalorder %s15, 1
    %p73 = por %p71, %p72
    %p74 = scmp.ne.s32.totalorder %s63, %s64
    %p75 = scmp.eq.s32.totalorder %s15, 0
    %p76 = por %p74, %p75
    %p77 = scmp.ne.s32.totalorder %s63, %s64
    %p78 = scmp.eq.s32.totalorder %s16, 1
    %p79 = por %p77, %p78
    %p81 = scmp.ne.s32.totalorder %s64, %s80
    %p82 = scmp.eq.s32.totalorder %s16, 0
    %p83 = por %p81, %p82
    %s84 = ssub.s32 %s17, %s29
    %p85 = scmp.eq.s32.totalorder %s84, 0
    %s87 = sadd.s32 %s86, 1
    %s88 = scalar_select %p85, %s86, %s87
    %p91 = pneg %p85
    %p92 = scmp.eq.s32.totalorder %s10, 1
    %p93 = por %p91, %p92
    %p94 = scmp.ne.s32.totalorder %s86, %s89
    %p95 = scmp.eq.s32.totalorder %s10, 0
    %p96 = por %p94, %p95
    %p97 = scmp.ne.s32.totalorder %s86, %s89
    %p98 = scmp.eq.s32.totalorder %s15, 1
    %p99 = por %p97, %p98
    %p100 = scmp.ne.s32.totalorder %s89, %s90
    %p101 = scmp.eq.s32.totalorder %s15, 0
    %p102 = por %p100, %p101
    %p103 = scmp.ne.s32.totalorder %s89, %s90
    %p104 = scmp.eq.s32.totalorder %s16, 1
    %p105 = por %p103, %p104
    %p107 = scmp.ne.s32.totalorder %s90, %s106
    %p108 = scmp.eq.s32.totalorder %s16, 0
    %p109 = por %p107, %p108
    %s110 = ssub.s32 %s17, %s29
    %p111 = scmp.eq.s32.totalorder %s110, 0
    %s113 = sadd.s32 %s112, 1
    %s114 = scalar_select %p111, %s112, %s113
    %p117 = pneg %p111
    %p118 = scmp.eq.s32.totalorder %s10, 1
    %p119 = por %p117, %p118
    %p120 = scmp.ne.s32.totalorder %s112, %s115
    %p121 = scmp.eq.s32.totalorder %s10, 0
    %p122 = por %p120, %p121
    %p123 = scmp.ne.s32.totalorder %s112, %s115
    %p124 = scmp.eq.s32.totalorder %s15, 1
    %p125 = por %p123, %p124
    %p126 = scmp.ne.s32.totalorder %s115, %s116
    %p127 = scmp.eq.s32.totalorder %s15, 0
    %p128 = por %p126, %p127
    %p129 = scmp.ne.s32.totalorder %s115, %s116
    %p130 = scmp.eq.s32.totalorder %s16, 1
    %p131 = por %p129, %p130
    %p133 = scmp.ne.s32.totalorder %s116, %s132
    %p134 = scmp.eq.s32.totalorder %s16, 0
    %p135 = por %p133, %p134
    %s136 = ssub.s32 %s17, %s29
    %s137 = ssub.s32 %s18, %s25
    %s138 = sor.u32 %s136, %s137
    %p139 = scmp.eq.s32.totalorder %s138, 0
    %s141 = sadd.s32 %s140, 1
    %s142 = scalar_select %p139, %s140, %s141
    %p145 = pneg %p139
    %p146 = scmp.eq.s32.totalorder %s10, 1
    %p147 = por %p145, %p146
    %p148 = scmp.ne.s32.totalorder %s140, %s143
    %p149 = scmp.eq.s32.totalorder %s10, 0
    %p150 = por %p148, %p149
    %p151 = scmp.ne.s32.totalorder %s140, %s143
    %p152 = scmp.eq.s32.totalorder %s15, 1
    %p153 = por %p151, %p152
    %p154 = scmp.ne.s32.totalorder %s143, %s144
    %p155 = scmp.eq.s32.totalorder %s15, 0
    %p156 = por %p154, %p155
    %p157 = scmp.ne.s32.totalorder %s143, %s144
    %p158 = scmp.eq.s32.totalorder %s16, 1
    %p159 = por %p157, %p158
    %p161 = scmp.ne.s32.totalorder %s144, %s160
    %p162 = scmp.eq.s32.totalorder %s16, 0
    %p163 = por %p161, %p162
    %p164 = scmp.le.s32.totalorder 1, %s10
    %p165 = scmp.lt.s32.totalorder %s10, 3
    %p166 = pnand %p164, %p165
    %p167 = pneg %p166
    // Predicated region
    $region9: #{distilbert_wrapper_forward.17} parent=5 // pred_check
      _
    $region10: #{distilbert_wrapper_forward.17} parent=5 // pred_check_branch
      %169 = sbr.rel (%p166) target = $region12
    $region11: #{distilbert_wrapper_forward.17} parent=5 // pred_region
      %s170 = ssub.s32 %s10, 1
    $region12: #{distilbert_wrapper_forward.17} parent=5 // pred_fallthru
      _
    %p171 = scmp.lt.s32.totalorder %s10, 2
    // Predicated region
    $region13: #{distilbert_wrapper_forward.17} parent=5 // pred_check
      %p172 = pneg %p171
    $region14: #{distilbert_wrapper_forward.17} parent=5 // pred_check_branch
      %174 = sbr.rel (%p172) target = $region16
    $region15: #{distilbert_wrapper_forward.17} parent=5 // pred_region
      // Predicated region
      $region17: #{distilbert_wrapper_forward.17} parent=15 // pred_check
        %p175 = pneg %p44
      $region18: #{distilbert_wrapper_forward.17} parent=15 // pred_check_branch
        %177 = sbr.rel (%p175) target = $region20
      $region19: #{distilbert_wrapper_forward.17} parent=15 // pred_region
        %p178 = scmp.lt.s32.totalorder %s17, 1
        %s179 = scalar_select %p178, %s17, 1
        %p180 = scmp.lt.s32.totalorder %s18, 0
        %s181 = scalar_select %p180, %s18, 0
        %s182 = smul.addr %s181, 3
        %s183 = smul.addr %s179, 3
        %s184 = sadd.s32 %s182, %s183
        %s185 = smul.addr %s184, 4
        %s186 = scalar_lea.vmem %s0, %s185
      $region20: #{distilbert_wrapper_forward.17} parent=15 // pred_fallthru
        _
      // Predicated region
      $region21: #{distilbert_wrapper_forward.17} parent=15 // pred_check
        %p187 = pneg %p70
      $region22: #{distilbert_wrapper_forward.17} parent=15 // pred_check_branch
        %189 = sbr.rel (%p187) target = $region24
      $region23: #{distilbert_wrapper_forward.17} parent=15 // pred_region
        %p190 = scmp.lt.s32.totalorder %s17, 1
        %s191 = scalar_select %p190, %s17, 1
        %s192 = smul.addr %s191, 3
        %s193 = sadd.s32 1, %s192
        %s194 = smul.addr %s193, 4
        %s195 = scalar_lea.vmem %s1, %s194
      $region24: #{distilbert_wrapper_forward.17} parent=15 // pred_fallthru
        _
      // Predicated region
      $region25: #{distilbert_wrapper_forward.17} parent=15 // pred_check
        %p196 = pneg %p96
      $region26: #{distilbert_wrapper_forward.17} parent=15 // pred_check_branch
        %198 = sbr.rel (%p196) target = $region28
      $region27: #{distilbert_wrapper_forward.17} parent=15 // pred_region
        %p199 = scmp.lt.s32.totalorder %s17, 1
        %s200 = scalar_select %p199, %s17, 1
        %s201 = smul.addr %s200, 3
        %s202 = sadd.s32 2, %s201
        %s203 = smul.addr %s202, 4
        %s204 = scalar_lea.vmem %s2, %s203
      $region28: #{distilbert_wrapper_forward.17} parent=15 // pred_fallthru
        _
      // Predicated region
      $region29: #{distilbert_wrapper_forward.17} parent=15 // pred_check
        %p205 = pneg %p122
      $region30: #{distilbert_wrapper_forward.17} parent=15 // pred_check_branch
        %207 = sbr.rel (%p205) target = $region32
      $region31: #{distilbert_wrapper_forward.17} parent=15 // pred_region
        %p208 = scmp.lt.s32.totalorder %s17, 1
        %s209 = scalar_select %p208, %s17, 1
        %s210 = scalar_lea.vmem %s3, %s209
      $region32: #{distilbert_wrapper_forward.17} parent=15 // pred_fallthru
        _
    $region16: #{distilbert_wrapper_forward.17} parent=5 // pred_fallthru
      _
    %p211 = scmp.le.s32.totalorder 1, %s10
    %p212 = scmp.lt.s32.totalorder %s10, 3
    %p213 = pnand %p211, %p212
    %p214 = pneg %p213
    // Predicated region
    $region33: #{distilbert_wrapper_forward.17} parent=5 // pred_check
      _
    $region34: #{distilbert_wrapper_forward.17} parent=5 // pred_check_branch
      %216 = sbr.rel (%p213) target = $region36
    $region35: #{distilbert_wrapper_forward.17} parent=5 // pred_region
      %s217 = ssub.s32 %s10, 1
      %p218 = scmp.lt.s32.totalorder %s19, 1
      %s219 = scalar_select %p218, %s19, 1
      %p220 = scmp.lt.s32.totalorder %s20, 0
      %s221 = scalar_select %p220, %s20, 0
      %s222 = smul.addr %s221, 3
      %s223 = smul.addr %s219, 3
      %s224 = sadd.s32 %s222, %s223
      %s225 = smul.addr %s224, 4
      %s226 = scalar_lea.vmem %s0, %s225
      %p227 = pneg %p50
      %p228 = pneg %p47
      %p229 = scmp.lt.s32.totalorder %s19, 1
      %s230 = scalar_select %p229, %s19, 1
      %s231 = smul.addr %s230, 3
      %s232 = sadd.s32 1, %s231
      %s233 = smul.addr %s232, 4
      %s234 = scalar_lea.vmem %s1, %s233
      %p235 = pneg %p76
      %p236 = pneg %p73
      %p237 = scmp.lt.s32.totalorder %s19, 1
      %s238 = scalar_select %p237, %s19, 1
      %s239 = smul.addr %s238, 3
      %s240 = sadd.s32 2, %s239
      %s241 = smul.addr %s240, 4
      %s242 = scalar_lea.vmem %s2, %s241
      %p243 = pneg %p102
      %p244 = pneg %p99
      %p245 = scmp.lt.s32.totalorder %s19, 1
      %s246 = scalar_select %p245, %s19, 1
      %s247 = scalar_lea.vmem %s3, %s246
      %p248 = pneg %p128
      %p249 = pneg %p125
      %p250 = pneg %p156
      %p251 = pneg %p153
      %p252 = scmp.lt.s32.totalorder %s19, 1
      %s253 = scalar_select %p252, %s19, 1
      %p254 = scmp.lt.s32.totalorder %s20, 0
      %s255 = scalar_select %p254, %s20, 0
      %s256 = sadd.s32 %s255, %s253
      %s257 = smul.addr %s256, 4
      %s258 = scalar_lea.vmem %s4, %s257
      %p259 = scmp.lt.s32.totalorder %s19, 1
      %s260 = scalar_select %p259, %s19, 1
      %p261 = scmp.lt.s32.totalorder %s20, 0
      %s262 = scalar_select %p261, %s20, 0
      %s263 = smul.addr %s262, 3
      %s264 = smul.addr %s260, 3
      %s265 = sadd.s32 %s263, %s264
      %s266 = smul.addr %s265, 4
      %s267 = scalar_lea.vmem %s0, %s266
      %p268 = scmp.lt.s32.totalorder %s19, 1
      %s269 = scalar_select %p268, %s19, 1
      %s270 = smul.addr %s269, 3
      %s271 = sadd.s32 1, %s270
      %s272 = smul.addr %s271, 4
      %s273 = scalar_lea.vmem %s1, %s272
      %p274 = scmp.lt.s32.totalorder %s19, 1
      %s275 = scalar_select %p274, %s19, 1
      %s276 = smul.addr %s275, 3
      %s277 = sadd.s32 2, %s276
      %s278 = smul.addr %s277, 4
      %s279 = scalar_lea.vmem %s2, %s278
      %p280 = scmp.lt.s32.totalorder %s19, 1
      %s281 = scalar_select %p280, %s19, 1
      %s282 = scalar_lea.vmem %s3, %s281
      %p283 = scmp.lt.s32.totalorder %s19, 1
      %s284 = scalar_select %p283, %s19, 1
      %p285 = scmp.lt.s32.totalorder %s20, 0
      %s286 = scalar_select %p285, %s20, 0
      %s287 = sadd.s32 %s286, %s284
      %s288 = smul.addr %s287, 4
      %s289 = scalar_lea.vmem %s4, %s288
      %v291 = vld [vmem:[%s267] sm:$0xf]
      %v292 = vld [vmem:[%s273] sm:$0xf]
      %v293 = vld [vmem:[%s279] sm:$0xf]
      %v294 = vld [vmem:[%s282] sm:$0x1]
      %v296 = vlaneseq
      %v297 = vshrl.u32 %v296, 7
      %v298 = vsub.s32 0, %v297
      %v299 = vrot.slane %v294, %v298
      %vm301 = vcmask 523264
      %v303 = vsel %vm301, %v291, 0
      %v306 = vsel %vm301, %v292, 0
      %308 = vmatprep.subr.bf16.mxu0 0
      %309 = vmatpush1.bf16.xpose.msra.mxu0 %v306
      %310 = vmatprep.subr.bf16.mxu0 0
      %311 = vmatpush1.bf16.xpose.msra.mxu0 0
      %312 = vmatprep.subr.bf16.mxu0 0
      %313 = vmatpush1.bf16.xpose.msra.mxu0 0
      %314 = vmatprep.subr.bf16.mxu0 0
      %315 = vmatpush1.bf16.xpose.msra.mxu0 0
      %316 = vmatprep.subr.bf16.mxu0 0
      %317 = vmatpush1.bf16.xpose.msra.mxu0 0
      %318 = vmatprep.subr.bf16.mxu0 0
      %319 = vmatpush1.bf16.xpose.msra.mxu0 0
      %320 = vmatprep.subr.bf16.mxu0 0
      %321 = vmatpush1.bf16.xpose.msra.mxu0 0
      %322 = vmatprep.subr.bf16.mxu0 0
      %323 = vmatpush1.bf16.xpose.msra.mxu0 0
      %324 = vmatprep.subr.bf16.mxu0 0
      %325 = vmatpush1.bf16.xpose.msra.mxu0 0
      %326 = vmatprep.subr.bf16.mxu0 0
      %327 = vmatpush1.bf16.xpose.msra.mxu0 0
      %328 = vmatprep.subr.bf16.mxu0 0
      %329 = vmatpush1.bf16.xpose.msra.mxu0 0
      %330 = vmatprep.subr.bf16.mxu0 0
      %331 = vmatpush1.bf16.xpose.msra.mxu0 0
      %332 = vmatprep.subr.bf16.mxu0 0
      %333 = vmatpush1.bf16.xpose.msra.mxu0 0
      %334 = vmatprep.subr.bf16.mxu0 0
      %335 = vmatpush1.bf16.xpose.msra.mxu0 0
      %336 = vmatprep.subr.bf16.mxu0 0
      %337 = vmatpush1.bf16.xpose.msra.mxu0 0
      %338 = vmatprep.subr.bf16.mxu0 0
      %339 = vmatpush1.bf16.xpose.msra.mxu0 0
      %340 = vmatprep.mubr.bf16.mxu0 0
      %341 = vmatmul.mubr.bf16.gmra.mrb[0].mxu0 %v303
      %v342 = vpop.f32.mrb[0].mxu0
      %v343 = vadd.f32 %v299, %v342
      %v344 = vpop.f32.mrb[0].mxu0
      %v345 = vpop.f32.mrb[0].mxu0
      %v346 = vpop.f32.mrb[0].mxu0
      %347 = vdwg.mxu0
      %vm348 = vcmask 64512
      %v349 = vsel %vm348, %v343, -inf
      %350 = vmax.xlane.f32.xlu0 %v349
      %v351 = vpop.xlane.xlu0 %350
      %v352 = vsub.f32 %v343, %v351
      %v353 = vmul.f32 %v352, 1.442695
      %v354 = vpow.pop %v353
      %v355 = vsel %vm348, %v354, 0.0
      %356 = vadd.xlane.f32.xlu0 %v355
      %v357 = vpop.xlane.xlu0 %356
      %v358 = vpack.c.bf16 %v354, %v354
      %v360 = vsel %vm348, %v358, 0
      %vm362 = vcmask 1043456
      %v364 = vsel %vm362, %v293, 0
      %366 = vmatprep.subr.bf16.mxu0 0
      %367 = vmatpush1.bf16.msra.mxu0 %v364
      %368 = vmatprep.subr.bf16.mxu0 0
      %369 = vmatpush1.bf16.msra.mxu0 0
      %370 = vmatprep.subr.bf16.mxu0 0
      %371 = vmatpush1.bf16.msra.mxu0 0
      %372 = vmatprep.subr.bf16.mxu0 0
      %373 = vmatpush1.bf16.msra.mxu0 0
      %374 = vmatprep.subr.bf16.mxu0 0
      %375 = vmatpush1.bf16.msra.mxu0 0
      %376 = vmatprep.subr.bf16.mxu0 0
      %377 = vmatpush1.bf16.msra.mxu0 0
      %378 = vmatprep.subr.bf16.mxu0 0
      %379 = vmatpush1.bf16.msra.mxu0 0
      %380 = vmatprep.subr.bf16.mxu0 0
      %381 = vmatpush1.bf16.msra.mxu0 0
      %382 = vmatprep.subr.bf16.mxu0 0
      %383 = vmatpush1.bf16.msra.mxu0 0
      %384 = vmatprep.subr.bf16.mxu0 0
      %385 = vmatpush1.bf16.msra.mxu0 0
      %386 = vmatprep.subr.bf16.mxu0 0
      %387 = vmatpush1.bf16.msra.mxu0 0
      %388 = vmatprep.subr.bf16.mxu0 0
      %389 = vmatpush1.bf16.msra.mxu0 0
      %390 = vmatprep.subr.bf16.mxu0 0
      %391 = vmatpush1.bf16.msra.mxu0 0
      %392 = vmatprep.subr.bf16.mxu0 0
      %393 = vmatpush1.bf16.msra.mxu0 0
      %394 = vmatprep.subr.bf16.mxu0 0
      %395 = vmatpush1.bf16.msra.mxu0 0
      %396 = vmatprep.subr.bf16.mxu0 0
      %397 = vmatpush1.bf16.msra.mxu0 0
      %398 = vmatprep.mubr.bf16.mxu0 0
      %399 = vmatmul.mubr.bf16.gmra.mrb[0].mxu0 %v360
      %v400 = vpop.f32.mrb[0].mxu0
      %v401 = vadd.f32 0.0, %v400
      %v402 = vpop.f32.mrb[0].mxu0
      %v403 = vpop.f32.mrb[0].mxu0
      %v404 = vpop.f32.mrb[0].mxu0
      %405 = vdwg.mxu0
      %v406 = vrcp.pop %v357
      %v407 = vmul.f32 1.0, %v406
      %v408 = vmul.f32 %v401, %v407
      %v410 = vunpack.c.l.b16 %v291
      %v411 = vpack.c.b16 %v410, %v410
      %412 = vrot.lane.b32.xlu0 %v411, 64
      %v413 = vpop.permute.xlu0 %412
      %v415 = vunpack.c.l.b16 %v292
      %v416 = vpack.c.b16 %v415, %v415
      %417 = vrot.lane.b32.xlu0 %v416, 64
      %v418 = vpop.permute.xlu0 %417
      %v420 = vsel %vm301, %v413, 0
      %v423 = vsel %vm301, %v418, 0
      %425 = vmatprep.subr.bf16.mxu0 0
      %426 = vmatpush1.bf16.xpose.msra.mxu0 %v423
      %427 = vmatprep.subr.bf16.mxu0 0
      %428 = vmatpush1.bf16.xpose.msra.mxu0 0
      %429 = vmatprep.subr.bf16.mxu0 0
      %430 = vmatpush1.bf16.xpose.msra.mxu0 0
      %431 = vmatprep.subr.bf16.mxu0 0
      %432 = vmatpush1.bf16.xpose.msra.mxu0 0
      %433 = vmatprep.subr.bf16.mxu0 0
      %434 = vmatpush1.bf16.xpose.msra.mxu0 0
      %435 = vmatprep.subr.bf16.mxu0 0
      %436 = vmatpush1.bf16.xpose.msra.mxu0 0
      %437 = vmatprep.subr.bf16.mxu0 0
      %438 = vmatpush1.bf16.xpose.msra.mxu0 0
      %439 = vmatprep.subr.bf16.mxu0 0
      %440 = vmatpush1.bf16.xpose.msra.mxu0 0
      %441 = vmatprep.subr.bf16.mxu0 0
      %442 = vmatpush1.bf16.xpose.msra.mxu0 0
      %443 = vmatprep.subr.bf16.mxu0 0
      %444 = vmatpush1.bf16.xpose.msra.mxu0 0
      %445 = vmatprep.subr.bf16.mxu0 0
      %446 = vmatpush1.bf16.xpose.msra.mxu0 0
      %447 = vmatprep.subr.bf16.mxu0 0
      %448 = vmatpush1.bf16.xpose.msra.mxu0 0
      %449 = vmatprep.subr.bf16.mxu0 0
      %450 = vmatpush1.bf16.xpose.msra.mxu0 0
      %451 = vmatprep.subr.bf16.mxu0 0
      %452 = vmatpush1.bf16.xpose.msra.mxu0 0
      %453 = vmatprep.subr.bf16.mxu0 0
      %454 = vmatpush1.bf16.xpose.msra.mxu0 0
      %455 = vmatprep.subr.bf16.mxu0 0
      %456 = vmatpush1.bf16.xpose.msra.mxu0 0
      %457 = vmatprep.mubr.bf16.mxu0 0
      %458 = vmatmul.mubr.bf16.gmra.mrb[0].mxu0 %v420
      %v459 = vpop.f32.mrb[0].mxu0
      %v460 = vadd.f32 %v299, %v459
      %v461 = vpop.f32.mrb[0].mxu0
      %v462 = vpop.f32.mrb[0].mxu0
      %v463 = vpop.f32.mrb[0].mxu0
      %464 = vdwg.mxu0
      %v465 = vsel %vm348, %v460, -inf
      %466 = vmax.xlane.f32.xlu0 %v465
      %v467 = vpop.xlane.xlu0 %466
      %v468 = vsub.f32 %v460, %v467
      %v469 = vmul.f32 %v468, 1.442695
      %v470 = vpow.pop %v469
      %v471 = vsel %vm348, %v470, 0.0
      %472 = vadd.xlane.f32.xlu0 %v471
      %v473 = vpop.xlane.xlu0 %472
      %v474 = vpack.c.bf16 %v470, %v470
      %v476 = vunpack.c.l.b16 %v293
      %v477 = vpack.c.b16 %v476, %v476
      %478 = vrot.lane.b32.xlu0 %v477, 64
      %v479 = vpop.permute.xlu0 %478
      %v481 = vsel %vm348, %v474, 0
      %v484 = vsel %vm362, %v479, 0
      %486 = vmatprep.subr.bf16.mxu0 0
      %487 = vmatpush1.bf16.msra.mxu0 %v484
      %488 = vmatprep.subr.bf16.mxu0 0
      %489 = vmatpush1.bf16.msra.mxu0 0
      %490 = vmatprep.subr.bf16.mxu0 0
      %491 = vmatpush1.bf16.msra.mxu0 0
      %492 = vmatprep.subr.bf16.mxu0 0
      %493 = vmatpush1.bf16.msra.mxu0 0
      %494 = vmatprep.subr.bf16.mxu0 0
      %495 = vmatpush1.bf16.msra.mxu0 0
      %496 = vmatprep.subr.bf16.mxu0 0
      %497 = vmatpush1.bf16.msra.mxu0 0
      %498 = vmatprep.subr.bf16.mxu0 0
      %499 = vmatpush1.bf16.msra.mxu0 0
      %500 = vmatprep.subr.bf16.mxu0 0
      %501 = vmatpush1.bf16.msra.mxu0 0
      %502 = vmatprep.subr.bf16.mxu0 0
      %503 = vmatpush1.bf16.msra.mxu0 0
      %504 = vmatprep.subr.bf16.mxu0 0
      %505 = vmatpush1.bf16.msra.mxu0 0
      %506 = vmatprep.subr.bf16.mxu0 0
      %507 = vmatpush1.bf16.msra.mxu0 0
      %508 = vmatprep.subr.bf16.mxu0 0
      %509 = vmatpush1.bf16.msra.mxu0 0
      %510 = vmatprep.subr.bf16.mxu0 0
      %511 = vmatpush1.bf16.msra.mxu0 0
      %512 = vmatprep.subr.bf16.mxu0 0
      %513 = vmatpush1.bf16.msra.mxu0 0
      %514 = vmatprep.subr.bf16.mxu0 0
      %515 = vmatpush1.bf16.msra.mxu0 0
      %516 = vmatprep.subr.bf16.mxu0 0
      %517 = vmatpush1.bf16.msra.mxu0 0
      %518 = vmatprep.mubr.bf16.mxu0 0
      %519 = vmatmul.mubr.bf16.gmra.mrb[0].mxu0 %v481
      %v520 = vpop.f32.mrb[0].mxu0
      %v521 = vadd.f32 0.0, %v520
      %v522 = vpop.f32.mrb[0].mxu0
      %v523 = vpop.f32.mrb[0].mxu0
      %v524 = vpop.f32.mrb[0].mxu0
      %525 = vdwg.mxu0
      %v526 = vrcp.pop %v473
      %v527 = vmul.f32 1.0, %v526
      %v528 = vmul.f32 %v521, %v527
      %530 = vrot.lane.b32.xlu0 %v528, 64
      %v531 = vpop.permute.xlu0 %530
      %v533 = vsel %vm301, %v408, %v531
      %v534 = vpack.c.bf16 %v533, %v533
      %535 = vst [vmem:[%s289] sm:$0xf] %v534
      %p536 = scmp.lt.s32.totalorder %s19, 1
      %s537 = scalar_select %p536, %s19, 1
      %p538 = scmp.lt.s32.totalorder %s20, 0
      %s539 = scalar_select %p538, %s20, 0
      %s540 = sadd.s32 %s539, %s537
      %s541 = smul.addr %s540, 4
      %s542 = scalar_lea.vmem %s4, %s541
      // Predicated region
      $region37: #{distilbert_wrapper_forward.17} parent=35 // pred_check
        %p543 = pneg %p153
      $region38: #{distilbert_wrapper_forward.17} parent=35 // pred_check_branch
        %545 = sbr.rel (%p543) target = $region40
      $region39: #{distilbert_wrapper_forward.17} parent=35 // pred_region
        _
      $region40: #{distilbert_wrapper_forward.17} parent=35 // pred_fallthru
        _
    $region36: #{distilbert_wrapper_forward.17} parent=5 // pred_fallthru
      _
    %p546 = scmp.le.s32.totalorder 2, %s10
    // Predicated region
    $region41: #{distilbert_wrapper_forward.17} parent=5 // pred_check
      %p547 = pneg %p546
    $region42: #{distilbert_wrapper_forward.17} parent=5 // pred_check_branch
      %549 = sbr.rel (%p547) target = $region44
    $region43: #{distilbert_wrapper_forward.17} parent=5 // pred_region
      %s550 = ssub.s32 %s10, 2
      // Predicated region
      $region45: #{distilbert_wrapper_forward.17} parent=43 // pred_check
        %p551 = pneg %p159
      $region46: #{distilbert_wrapper_forward.17} parent=43 // pred_check_branch
        %553 = sbr.rel (%p551) target = $region48
      $region47: #{distilbert_wrapper_forward.17} parent=43 // pred_region
        %p554 = scmp.lt.s32.totalorder %s21, 1
        %s555 = scalar_select %p554, %s21, 1
        %p556 = scmp.lt.s32.totalorder %s22, 0
        %s557 = scalar_select %p556, %s22, 0
        %s558 = sadd.s32 %s557, %s555
        %s559 = smul.addr %s558, 4
        %s560 = scalar_lea.vmem %s4, %s559
      $region48: #{distilbert_wrapper_forward.17} parent=43 // pred_fallthru
        _
    $region44: #{distilbert_wrapper_forward.17} parent=5 // pred_fallthru
      _
  $region6: #{distilbert_wrapper_forward.17} parent=0 // loop_footer
    %s14 = sadd.s32 1, %s10
  $region7: #{distilbert_wrapper_forward.17} parent=0 // loop_footer_branch
    %9 = sbr.rel target = $region3
  $region8: #{distilbert_wrapper_forward.17} parent=0 // loop_exit
    _

// kernel: distilbert_wrapper_forward.16
$region0: #{distilbert_wrapper_forward.16}
  #allocation0 [shape = 'u32[]', space=smem, size = 0x4, offset = 0x4, fixed_abs, tag = 'smem constant byte address 0x4 - core index']
  #allocation1 [shape = 'u32[144,128]{1,0:T(1,128)}', space=vmem, size = 0x12000, scoped, tag = 'internal scratch']
  %s0 = inlined_call_operand.vmem [shape: bf16[16,128], index: 0, kind: input, shape index: {}]
  %s1 = inlined_call_operand.vmem [shape: bf16[128,384], index: 1, kind: input, shape index: {}]
  %s2 = inlined_call_operand.vmem [shape: f32[1,384], index: 2, kind: input, shape index: {}]
  %s3 = inlined_call_operand.vmem [shape: bf16[16,384], index: 3, kind: output, shape index: {}]
  %s4 = sld [smem:[#allocation0]]
  $region22: #{distilbert_wrapper_forward.16} parent=0
    _
  %s6 = ssub.s32 1, %s4
  %s7 = scalar_select 0, %s6, %s4
  // Predicated region
  $region2: #{distilbert_wrapper_forward.16} parent=0 // pred_check
    _
  $region3: #{distilbert_wrapper_forward.16} parent=0 // pred_check_branch
    %9 = sbr.rel (0) target = $region5
  $region4: #{distilbert_wrapper_forward.16} parent=0 // pred_region
    _
  $region5: #{distilbert_wrapper_forward.16} parent=0 // pred_fallthru
    _
  // Predicated region
  $region6: #{distilbert_wrapper_forward.16} parent=0 // pred_check
    _
  $region7: #{distilbert_wrapper_forward.16} parent=0 // pred_check_branch
    %11 = sbr.rel (0) target = $region9
  $region8: #{distilbert_wrapper_forward.16} parent=0 // pred_region
    _
  $region9: #{distilbert_wrapper_forward.16} parent=0 // pred_fallthru
    _
  // Predicated region
  $region10: #{distilbert_wrapper_forward.16} parent=0 // pred_check
    _
  $region11: #{distilbert_wrapper_forward.16} parent=0 // pred_check_branch
    %13 = sbr.rel (0) target = $region13
  $region12: #{distilbert_wrapper_forward.16} parent=0 // pred_region
    _
  $region13: #{distilbert_wrapper_forward.16} parent=0 // pred_fallthru
    _
  %v15 = vld [vmem:[%s0] sm:$0xf]
  %v16 = vld [vmem:[%s0 + $0x4] sm:$0xf]
  %v17 = vld [vmem:[%s1] sm:$0xff]
  %v18 = vld [vmem:[%s1 + $0x8] sm:$0xf]
  %v19 = vld [vmem:[%s1 + $0xc] sm:$0xff]
  %v20 = vld [vmem:[%s1 + $0x14] sm:$0xf]
  %v21 = vld [vmem:[%s1 + $0x18] sm:$0xff]
  %v22 = vld [vmem:[%s1 + $0x20] sm:$0xf]
  %v23 = vld [vmem:[%s1 + $0x24] sm:$0xff]
  %v24 = vld [vmem:[%s1 + $0x2c] sm:$0xf]
  %v25 = vld [vmem:[%s1 + $0x30] sm:$0xff]
  %v26 = vld [vmem:[%s1 + $0x38] sm:$0xf]
  %v27 = vld [vmem:[%s1 + $0x3c] sm:$0xff]
  %v28 = vld [vmem:[%s1 + $0x44] sm:$0xf]
  %v29 = vld [vmem:[%s1 + $0x48] sm:$0xff]
  %v30 = vld [vmem:[%s1 + $0x50] sm:$0xf]
  %v31 = vld [vmem:[%s1 + $0x54] sm:$0xff]
  %v32 = vld [vmem:[%s1 + $0x5c] sm:$0xf]
  %v33 = vld [vmem:[%s1 + $0x60] sm:$0xff]
  %v34 = vld [vmem:[%s1 + $0x68] sm:$0xf]
  %v35 = vld [vmem:[%s1 + $0x6c] sm:$0xff]
  %v36 = vld [vmem:[%s1 + $0x74] sm:$0xf]
  %v37 = vld [vmem:[%s1 + $0x78] sm:$0xff]
  %v38 = vld [vmem:[%s1 + $0x80] sm:$0xf]
  %v39 = vld [vmem:[%s1 + $0x84] sm:$0xff]
  %v40 = vld [vmem:[%s1 + $0x8c] sm:$0xf]
  %v41 = vld [vmem:[%s1 + $0x90] sm:$0xff]
  %v42 = vld [vmem:[%s1 + $0x98] sm:$0xf]
  %v43 = vld [vmem:[%s1 + $0x9c] sm:$0xff]
  %v44 = vld [vmem:[%s1 + $0xa4] sm:$0xf]
  %v45 = vld [vmem:[%s1 + $0xa8] sm:$0xff]
  %v46 = vld [vmem:[%s1 + $0xb0] sm:$0xf]
  %v47 = vld [vmem:[%s1 + $0xb4] sm:$0xff]
  %v48 = vld [vmem:[%s1 + $0xbc] sm:$0xf]
  %v49 = vld [vmem:[%s2] sm:$0x7]
  %v51 = vlaneseq
  %v52 = vshrl.u32 %v51, 7
  %v53 = vsub.s32 0, %v52
  %v54 = vrot.slane %v49, %v53
  %v55 = vlaneseq
  %v56 = vshrl.u32 %v55, 7
  %v57 = vsub.s32 1, %v56
  %v58 = vrot.slane %v49, %v57
  %v59 = vlaneseq
  %v60 = vshrl.u32 %v59, 7
  %v61 = vsub.s32 2, %v60
  %v62 = vrot.slane %v49, %v61
  %v68 = vunpack.c.l.b16 %v15
  %v69 = vunpack.c.l.b16 %v16
  %v70 = vpack.c.b16 %v69, %v68
  %v104 = vunpack.c.l.b16 %v17
  %v105 = vunpack.c.h.b16 %v17
  %v106 = vunpack.c.l.b16 %v18
  %v107 = vunpack.c.l.b16 %v19
  %v108 = vunpack.c.h.b16 %v19
  %v109 = vunpack.c.l.b16 %v20
  %v110 = vunpack.c.l.b16 %v21
  %v111 = vunpack.c.h.b16 %v21
  %v112 = vunpack.c.l.b16 %v22
  %v113 = vunpack.c.l.b16 %v23
  %v114 = vunpack.c.h.b16 %v23
  %v115 = vunpack.c.l.b16 %v24
  %v116 = vunpack.c.l.b16 %v25
  %v117 = vunpack.c.h.b16 %v25
  %v118 = vunpack.c.l.b16 %v26
  %v119 = vunpack.c.l.b16 %v27
  %v120 = vunpack.c.h.b16 %v27
  %v121 = vunpack.c.l.b16 %v28
  %v122 = vunpack.c.l.b16 %v29
  %v123 = vunpack.c.h.b16 %v29
  %v124 = vunpack.c.l.b16 %v30
  %v125 = vunpack.c.l.b16 %v31
  %v126 = vunpack.c.h.b16 %v31
  %v127 = vunpack.c.l.b16 %v32
  %v128 = vunpack.c.l.b16 %v33
  %v129 = vunpack.c.h.b16 %v33
  %v130 = vunpack.c.l.b16 %v34
  %v131 = vunpack.c.l.b16 %v35
  %v132 = vunpack.c.h.b16 %v35
  %v133 = vunpack.c.l.b16 %v36
  %v134 = vunpack.c.l.b16 %v37
  %v135 = vunpack.c.h.b16 %v37
  %v136 = vunpack.c.l.b16 %v38
  %v137 = vunpack.c.l.b16 %v39
  %v138 = vunpack.c.h.b16 %v39
  %v139 = vunpack.c.l.b16 %v40
  %v140 = vunpack.c.l.b16 %v41
  %v141 = vunpack.c.h.b16 %v41
  %v142 = vunpack.c.l.b16 %v42
  %v143 = vunpack.c.l.b16 %v43
  %v144 = vunpack.c.h.b16 %v43
  %v145 = vunpack.c.l.b16 %v44
  %v146 = vunpack.c.l.b16 %v45
  %v147 = vunpack.c.h.b16 %v45
  %v148 = vunpack.c.l.b16 %v46
  %v149 = vunpack.c.l.b16 %v47
  %v150 = vunpack.c.h.b16 %v47
  %v151 = vunpack.c.l.b16 %v48
  %v152 = vpack.c.b16 %v107, %v104
  %v153 = vpack.c.b16 %v108, %v105
  %v154 = vpack.c.b16 %v109, %v106
  %v155 = vpack.c.b16 %v113, %v110
  %v156 = vpack.c.b16 %v114, %v111
  %v157 = vpack.c.b16 %v115, %v112
  %v158 = vpack.c.b16 %v119, %v116
  %v159 = vpack.c.b16 %v120, %v117
  %v160 = vpack.c.b16 %v121, %v118
  %v161 = vpack.c.b16 %v125, %v122
  %v162 = vpack.c.b16 %v126, %v123
  %v163 = vpack.c.b16 %v127, %v124
  %v164 = vpack.c.b16 %v131, %v128
  %v165 = vpack.c.b16 %v132, %v129
  %v166 = vpack.c.b16 %v133, %v130
  %v167 = vpack.c.b16 %v137, %v134
  %v168 = vpack.c.b16 %v138, %v135
  %v169 = vpack.c.b16 %v139, %v136
  %v170 = vpack.c.b16 %v143, %v140
  %v171 = vpack.c.b16 %v144, %v141
  %v172 = vpack.c.b16 %v145, %v142
  %v173 = vpack.c.b16 %v149, %v146
  %v174 = vpack.c.b16 %v150, %v147
  %v175 = vpack.c.b16 %v151, %v148
  %200 = vmatprep.subr.bf16.mxu0 %v153
  %201 = vmatpush1.bf16.msra.mxu0 %v152
  %202 = vmatprep.subr.bf16.mxu0 %v156
  %203 = vmatpush1.bf16.msra.mxu0 %v155
  %204 = vmatprep.subr.bf16.mxu0 %v159
  %205 = vmatpush1.bf16.msra.mxu0 %v158
  %206 = vmatprep.subr.bf16.mxu0 %v162
  %207 = vmatpush1.bf16.msra.mxu0 %v161
  %208 = vmatprep.subr.bf16.mxu0 %v165
  %209 = vmatpush1.bf16.msra.mxu0 %v164
  %210 = vmatprep.subr.bf16.mxu0 %v168
  %211 = vmatpush1.bf16.msra.mxu0 %v167
  %212 = vmatprep.subr.bf16.mxu0 %v171
  %213 = vmatpush1.bf16.msra.mxu0 %v170
  %214 = vmatprep.subr.bf16.mxu0 %v174
  %215 = vmatpush1.bf16.msra.mxu0 %v173
  %216 = vmatprep.subr.bf16.mxu0 0
  %217 = vmatpush1.bf16.msra.mxu0 0
  %218 = vmatprep.subr.bf16.mxu0 0
  %219 = vmatpush1.bf16.msra.mxu0 0
  %220 = vmatprep.subr.bf16.mxu0 0
  %221 = vmatpush1.bf16.msra.mxu0 0
  %222 = vmatprep.subr.bf16.mxu0 0
  %223 = vmatpush1.bf16.msra.mxu0 0
  %224 = vmatprep.subr.bf16.mxu0 0
  %225 = vmatpush1.bf16.msra.mxu0 0
  %226 = vmatprep.subr.bf16.mxu0 0
  %227 = vmatpush1.bf16.msra.mxu0 0
  %228 = vmatprep.subr.bf16.mxu0 0
  %229 = vmatpush1.bf16.msra.mxu0 0
  %230 = vmatprep.subr.bf16.mxu0 0
  %231 = vmatpush1.bf16.msra.mxu0 0
  %232 = vmatprep.mubr.bf16.mxu0 0
  %233 = vmatmul.mubr.bf16.gmra.mrb[0].mxu0 %v70
  %v234 = vpop.f32.mrb[0].mxu0
  %v235 = vadd.f32 %v54, %v234
  %v236 = vpop.f32.mrb[0].mxu0
  %v237 = vadd.f32 %v58, %v236
  %v238 = vpop.f32.mrb[0].mxu0
  %v239 = vadd.f32 %v54, %v238
  %v240 = vpop.f32.mrb[0].mxu0
  %v241 = vadd.f32 %v58, %v240
  %242 = vdwg.mxu0
  %243 = vmatprep.subr.bf16.mxu0 0
  %244 = vmatpush1.bf16.msra.mxu0 %v154
  %245 = vmatprep.subr.bf16.mxu0 0
  %246 = vmatpush1.bf16.msra.mxu0 %v157
  %247 = vmatprep.subr.bf16.mxu0 0
  %248 = vmatpush1.bf16.msra.mxu0 %v160
  %249 = vmatprep.subr.bf16.mxu0 0
  %250 = vmatpush1.bf16.msra.mxu0 %v163
  %251 = vmatprep.subr.bf16.mxu0 0
  %252 = vmatpush1.bf16.msra.mxu0 %v166
  %253 = vmatprep.subr.bf16.mxu0 0
  %254 = vmatpush1.bf16.msra.mxu0 %v169
  %255 = vmatprep.subr.bf16.mxu0 0
  %256 = vmatpush1.bf16.msra.mxu0 %v172
  %257 = vmatprep.subr.bf16.mxu0 0
  %258 = vmatpush1.bf16.msra.mxu0 %v175
  %259 = vmatprep.subr.bf16.mxu0 0
  %260 = vmatpush1.bf16.msra.mxu0 0
  %261 = vmatprep.subr.bf16.mxu0 0
  %262 = vmatpush1.bf16.msra.mxu0 0
  %263 = vmatprep.subr.bf16.mxu0 0
  %264 = vmatpush1.bf16.msra.mxu0 0
  %265 = vmatprep.subr.bf16.mxu0 0
  %266 = vmatpush1.bf16.msra.mxu0 0
  %267 = vmatprep.subr.bf16.mxu0 0
  %268 = vmatpush1.bf16.msra.mxu0 0
  %269 = vmatprep.subr.bf16.mxu0 0
  %270 = vmatpush1.bf16.msra.mxu0 0
  %271 = vmatprep.subr.bf16.mxu0 0
  %272 = vmatpush1.bf16.msra.mxu0 0
  %273 = vmatprep.subr.bf16.mxu0 0
  %274 = vmatpush1.bf16.msra.mxu0 0
  %275 = vmatprep.mubr.bf16.mxu0 0
  %276 = vmatmul.mubr.bf16.gmra.mrb[0].mxu0 %v70
  %v277 = vpop.f32.mrb[0].mxu0
  %v278 = vadd.f32 %v62, %v277
  %v279 = vpop.f32.mrb[0].mxu0
  %v280 = vpop.f32.mrb[0].mxu0
  %v281 = vadd.f32 %v62, %v280
  %v282 = vpop.f32.mrb[0].mxu0
  %283 = vdwg.mxu0
  %v284 = vpack.c.bf16 %v239, %v235
  %v285 = vpack.c.bf16 %v241, %v237
  %v286 = vpack.c.bf16 %v281, %v278
  %v290 = vunpack.c.l.b16 %v284
  %v291 = vunpack.c.l.b16 %v285
  %v292 = vunpack.c.l.b16 %v286
  %v293 = vunpack.c.h.b16 %v284
  %v294 = vunpack.c.h.b16 %v285
  %v295 = vunpack.c.h.b16 %v286
  %v296 = vpack.c.b16 %v291, %v290
  %v297 = vpack.c.b16 %v292, %v292
  %v298 = vpack.c.b16 %v294, %v293
  %v299 = vpack.c.b16 %v295, %v295
  %304 = vst [vmem:[%s3] sm:$0xff] %v296
  %305 = vst [vmem:[%s3 + $0x8] sm:$0xf] %v297
  %306 = vst [vmem:[%s3 + $0xc] sm:$0xff] %v298
  %307 = vst [vmem:[%s3 + $0x14] sm:$0xf] %v299
  // Predicated region
  $region14: #{distilbert_wrapper_forward.16} parent=0 // pred_check
    _
  $region15: #{distilbert_wrapper_forward.16} parent=0 // pred_check_branch
    %309 = sbr.rel (0) target = $region17
  $region16: #{distilbert_wrapper_forward.16} parent=0 // pred_region
    _
  $region17: #{distilbert_wrapper_forward.16} parent=0 // pred_fallthru
    _
  // Predicated region
  $region18: #{distilbert_wrapper_forward.16} parent=0 // pred_check
    _
  $region19: #{distilbert_wrapper_forward.16} parent=0 // pred_check_branch
    %311 = sbr.rel (0) target = $region21
  $region20: #{distilbert_wrapper_forward.16} parent=0 // pred_region
    _
  $region21: #{distilbert_wrapper_forward.16} parent=0 // pred_fallthru
    _

// kernel: distilbert_wrapper_forward.18
$region0: #{distilbert_wrapper_forward.18}
  #allocation0 [shape = 'u32[]', space=smem, size = 0x4, offset = 0x4, fixed_abs, tag = 'smem constant byte address 0x4 - core index']
  #allocation1 [shape = 'u32[144,128]{1,0:T(1,128)}', space=vmem, size = 0x12000, scoped, tag = 'internal scratch']
  %s0 = inlined_call_operand.vmem [shape: bf16[16,128], index: 0, kind: input, shape index: {}]
  %s1 = inlined_call_operand.vmem [shape: bf16[128,128], index: 1, kind: input, shape index: {}]
  %s2 = inlined_call_operand.vmem [shape: f32[1,128], index: 2, kind: input, shape index: {}]
  %s3 = inlined_call_operand.vmem [shape: bf16[16,128], index: 3, kind: output, shape index: {}]
  %s4 = sld [smem:[#allocation0]]
  $region22: #{distilbert_wrapper_forward.18} parent=0
    _
  %s6 = ssub.s32 1, %s4
  %s7 = scalar_select 0, %s6, %s4
  // Predicated region
  $region2: #{distilbert_wrapper_forward.18} parent=0 // pred_check
    _
  $region3: #{distilbert_wrapper_forward.18} parent=0 // pred_check_branch
    %9 = sbr.rel (0) target = $region5
  $region4: #{distilbert_wrapper_forward.18} parent=0 // pred_region
    _
  $region5: #{distilbert_wrapper_forward.18} parent=0 // pred_fallthru
    _
  // Predicated region
  $region6: #{distilbert_wrapper_forward.18} parent=0 // pred_check
    _
  $region7: #{distilbert_wrapper_forward.18} parent=0 // pred_check_branch
    %11 = sbr.rel (0) target = $region9
  $region8: #{distilbert_wrapper_forward.18} parent=0 // pred_region
    _
  $region9: #{distilbert_wrapper_forward.18} parent=0 // pred_fallthru
    _
  // Predicated region
  $region10: #{distilbert_wrapper_forward.18} parent=0 // pred_check
    _
  $region11: #{distilbert_wrapper_forward.18} parent=0 // pred_check_branch
    %13 = sbr.rel (0) target = $region13
  $region12: #{distilbert_wrapper_forward.18} parent=0 // pred_region
    _
  $region13: #{distilbert_wrapper_forward.18} parent=0 // pred_fallthru
    _
  %v15 = vld [vmem:[%s0] sm:$0xf]
  %v16 = vld [vmem:[%s0 + $0x4] sm:$0xf]
  %v17 = vld [vmem:[%s1] sm:$0xf]
  %v18 = vld [vmem:[%s1 + $0x4] sm:$0xf]
  %v19 = vld [vmem:[%s1 + $0x8] sm:$0xf]
  %v20 = vld [vmem:[%s1 + $0xc] sm:$0xf]
  %v21 = vld [vmem:[%s1 + $0x10] sm:$0xf]
  %v22 = vld [vmem:[%s1 + $0x14] sm:$0xf]
  %v23 = vld [vmem:[%s1 + $0x18] sm:$0xf]
  %v24 = vld [vmem:[%s1 + $0x1c] sm:$0xf]
  %v25 = vld [vmem:[%s1 + $0x20] sm:$0xf]
  %v26 = vld [vmem:[%s1 + $0x24] sm:$0xf]
  %v27 = vld [vmem:[%s1 + $0x28] sm:$0xf]
  %v28 = vld [vmem:[%s1 + $0x2c] sm:$0xf]
  %v29 = vld [vmem:[%s1 + $0x30] sm:$0xf]
  %v30 = vld [vmem:[%s1 + $0x34] sm:$0xf]
  %v31 = vld [vmem:[%s1 + $0x38] sm:$0xf]
  %v32 = vld [vmem:[%s1 + $0x3c] sm:$0xf]
  %v33 = vld [vmem:[%s2] sm:$0x1]
  %v35 = vlaneseq
  %v36 = vshrl.u32 %v35, 7
  %v37 = vsub.s32 0, %v36
  %v38 = vrot.slane %v33, %v37
  %v42 = vunpack.c.l.b16 %v15
  %v43 = vunpack.c.l.b16 %v16
  %v44 = vpack.c.b16 %v43, %v42
  %v62 = vunpack.c.l.b16 %v17
  %v63 = vunpack.c.l.b16 %v18
  %v64 = vunpack.c.l.b16 %v19
  %v65 = vunpack.c.l.b16 %v20
  %v66 = vunpack.c.l.b16 %v21
  %v67 = vunpack.c.l.b16 %v22
  %v68 = vunpack.c.l.b16 %v23
  %v69 = vunpack.c.l.b16 %v24
  %v70 = vunpack.c.l.b16 %v25
  %v71 = vunpack.c.l.b16 %v26
  %v72 = vunpack.c.l.b16 %v27
  %v73 = vunpack.c.l.b16 %v28
  %v74 = vunpack.c.l.b16 %v29
  %v75 = vunpack.c.l.b16 %v30
  %v76 = vunpack.c.l.b16 %v31
  %v77 = vunpack.c.l.b16 %v32
  %v78 = vpack.c.b16 %v63, %v62
  %v79 = vpack.c.b16 %v65, %v64
  %v80 = vpack.c.b16 %v67, %v66
  %v81 = vpack.c.b16 %v69, %v68
  %v82 = vpack.c.b16 %v71, %v70
  %v83 = vpack.c.b16 %v73, %v72
  %v84 = vpack.c.b16 %v75, %v74
  %v85 = vpack.c.b16 %v77, %v76
  %94 = vmatprep.subr.bf16.mxu0 0
  %95 = vmatpush1.bf16.msra.mxu0 %v78
  %96 = vmatprep.subr.bf16.mxu0 0
  %97 = vmatpush1.bf16.msra.mxu0 %v79
  %98 = vmatprep.subr.bf16.mxu0 0
  %99 = vmatpush1.bf16.msra.mxu0 %v80
  %100 = vmatprep.subr.bf16.mxu0 0
  %101 = vmatpush1.bf16.msra.mxu0 %v81
  %102 = vmatprep.subr.bf16.mxu0 0
  %103 = vmatpush1.bf16.msra.mxu0 %v82
  %104 = vmatprep.subr.bf16.mxu0 0
  %105 = vmatpush1.bf16.msra.mxu0 %v83
  %106 = vmatprep.subr.bf16.mxu0 0
  %107 = vmatpush1.bf16.msra.mxu0 %v84
  %108 = vmatprep.subr.bf16.mxu0 0
  %109 = vmatpush1.bf16.msra.mxu0 %v85
  %110 = vmatprep.subr.bf16.mxu0 0
  %111 = vmatpush1.bf16.msra.mxu0 0
  %112 = vmatprep.subr.bf16.mxu0 0
  %113 = vmatpush1.bf16.msra.mxu0 0
  %114 = vmatprep.subr.bf16.mxu0 0
  %115 = vmatpush1.bf16.msra.mxu0 0
  %116 = vmatprep.subr.bf16.mxu0 0
  %117 = vmatpush1.bf16.msra.mxu0 0
  %118 = vmatprep.subr.bf16.mxu0 0
  %119 = vmatpush1.bf16.msra.mxu0 0
  %120 = vmatprep.subr.bf16.mxu0 0
  %121 = vmatpush1.bf16.msra.mxu0 0
  %122 = vmatprep.subr.bf16.mxu0 0
  %123 = vmatpush1.bf16.msra.mxu0 0
  %124 = vmatprep.subr.bf16.mxu0 0
  %125 = vmatpush1.bf16.msra.mxu0 0
  %126 = vmatprep.mubr.bf16.mxu0 0
  %127 = vmatmul.mubr.bf16.gmra.mrb[0].mxu0 %v44
  %v128 = vpop.f32.mrb[0].mxu0
  %v129 = vadd.f32 %v38, %v128
  %v130 = vpop.f32.mrb[0].mxu0
  %v131 = vpop.f32.mrb[0].mxu0
  %v132 = vadd.f32 %v38, %v131
  %v133 = vpop.f32.mrb[0].mxu0
  %134 = vdwg.mxu0
  %v135 = vpack.c.bf16 %v132, %v129
  %v137 = vunpack.c.l.b16 %v135
  %v138 = vunpack.c.h.b16 %v135
  %v139 = vpack.c.b16 %v137, %v137
  %v140 = vpack.c.b16 %v138, %v138
  %143 = vst [vmem:[%s3] sm:$0xf] %v139
  %144 = vst [vmem:[%s3 + $0x4] sm:$0xf] %v140
  // Predicated region
  $region14: #{distilbert_wrapper_forward.18} parent=0 // pred_check
    _
  $region15: #{distilbert_wrapper_forward.18} parent=0 // pred_check_branch
    %146 = sbr.rel (0) target = $region17
  $region16: #{distilbert_wrapper_forward.18} parent=0 // pred_region
    _
  $region17: #{distilbert_wrapper_forward.18} parent=0 // pred_fallthru
    _
  // Predicated region
  $region18: #{distilbert_wrapper_forward.18} parent=0 // pred_check
    _
  $region19: #{distilbert_wrapper_forward.18} parent=0 // pred_check_branch
    %148 = sbr.rel (0) target = $region21
  $region20: #{distilbert_wrapper_forward.18} parent=0 // pred_region
    _
  $region21: #{distilbert_wrapper_forward.18} parent=0 // pred_fallthru
    _

// kernel: distilbert_wrapper_forward.19
$region0: #{distilbert_wrapper_forward.19}
  #allocation0 [shape = 'u32[]', space=smem, size = 0x4, offset = 0x4, fixed_abs, tag = 'smem constant byte address 0x4 - core index']
  #allocation1 [shape = 'u32[144,128]{1,0:T(1,128)}', space=vmem, size = 0x12000, scoped, tag = 'internal scratch']
  %s0 = inlined_call_operand.vmem [shape: bf16[16,128], index: 0, kind: input, shape index: {}]
  %s1 = inlined_call_operand.vmem [shape: bf16[16,128], index: 1, kind: input, shape index: {}]
  %s2 = inlined_call_operand.vmem [shape: f32[1,128], index: 2, kind: input, shape index: {}]
  %s3 = inlined_call_operand.vmem [shape: f32[1,128], index: 3, kind: input, shape index: {}]
  %s4 = inlined_call_operand.vmem [shape: bf16[16,128], index: 4, kind: output, shape index: {}]
  %s5 = sld [smem:[#allocation0]]
  $region26: #{distilbert_wrapper_forward.19} parent=0
    _
  %s7 = ssub.s32 1, %s5
  %s8 = scalar_select 0, %s7, %s5
  // Predicated region
  $region2: #{distilbert_wrapper_forward.19} parent=0 // pred_check
    _
  $region3: #{distilbert_wrapper_forward.19} parent=0 // pred_check_branch
    %10 = sbr.rel (0) target = $region5
  $region4: #{distilbert_wrapper_forward.19} parent=0 // pred_region
    _
  $region5: #{distilbert_wrapper_forward.19} parent=0 // pred_fallthru
    _
  // Predicated region
  $region6: #{distilbert_wrapper_forward.19} parent=0 // pred_check
    _
  $region7: #{distilbert_wrapper_forward.19} parent=0 // pred_check_branch
    %12 = sbr.rel (0) target = $region9
  $region8: #{distilbert_wrapper_forward.19} parent=0 // pred_region
    _
  $region9: #{distilbert_wrapper_forward.19} parent=0 // pred_fallthru
    _
  // Predicated region
  $region10: #{distilbert_wrapper_forward.19} parent=0 // pred_check
    _
  $region11: #{distilbert_wrapper_forward.19} parent=0 // pred_check_branch
    %14 = sbr.rel (0) target = $region13
  $region12: #{distilbert_wrapper_forward.19} parent=0 // pred_region
    _
  $region13: #{distilbert_wrapper_forward.19} parent=0 // pred_fallthru
    _
  // Predicated region
  $region14: #{distilbert_wrapper_forward.19} parent=0 // pred_check
    _
  $region15: #{distilbert_wrapper_forward.19} parent=0 // pred_check_branch
    %16 = sbr.rel (0) target = $region17
  $region16: #{distilbert_wrapper_forward.19} parent=0 // pred_region
    _
  $region17: #{distilbert_wrapper_forward.19} parent=0 // pred_fallthru
    _
  %v17 = vld [vmem:[%s0] sm:$0xf]
  %v18 = vld [vmem:[%s0 + $0x4] sm:$0xf]
  %v19 = vunpack.c.l.bf16 %v17
  %v20 = vunpack.c.l.bf16 %v18
  %v21 = vld [vmem:[%s1] sm:$0xf]
  %v22 = vld [vmem:[%s1 + $0x4] sm:$0xf]
  %v23 = vunpack.c.l.bf16 %v21
  %v24 = vunpack.c.l.bf16 %v22
  %v25 = vadd.f32 %v19, %v23
  %v26 = vadd.f32 %v20, %v24
  %27 = vadd.xlane.f32.xlu0 %v25
  %v28 = vpop.xlane.xlu0 %27
  %29 = vadd.xlane.f32.xlu0 %v26
  %v30 = vpop.xlane.xlu0 %29
  %v31 = vrcp.pop 128.0
  %v32 = vmul.f32 %v28, %v31
  %v33 = vmul.f32 %v30, %v31
  %v34 = vsub.f32 %v25, %v32
  %v35 = vsub.f32 %v26, %v33
  %v36 = vmul.f32 %v34, %v34
  %v37 = vmul.f32 %v35, %v35
  %38 = vadd.xlane.f32.xlu0 %v36
  %v39 = vpop.xlane.xlu0 %38
  %40 = vadd.xlane.f32.xlu0 %v37
  %v41 = vpop.xlane.xlu0 %40
  %v42 = vmul.f32 %v39, %v31
  %v43 = vmul.f32 %v41, %v31
  %v44 = vadd.f32 %v42, 1e-12
  %v45 = vadd.f32 %v43, 1e-12
  %v46 = vrsqrt.pop %v44
  %v47 = vrsqrt.pop %v45
  %v48 = vmul.f32 %v34, %v46
  %v49 = vmul.f32 %v35, %v47
  %v50 = vld [vmem:[%s2] sm:$0x1]
  %v52 = vlaneseq
  %v53 = vshrl.u32 %v52, 7
  %v54 = vsub.s32 0, %v53
  %v55 = vrot.slane %v50, %v54
  %v57 = vmul.f32 %v48, %v55
  %v58 = vmul.f32 %v49, %v55
  %v59 = vld [vmem:[%s3] sm:$0x1]
  %v61 = vlaneseq
  %v62 = vshrl.u32 %v61, 7
  %v63 = vsub.s32 0, %v62
  %v64 = vrot.slane %v59, %v63
  %v66 = vadd.f32 %v57, %v64
  %v67 = vadd.f32 %v58, %v64
  %v68 = vpack.c.bf16 %v67, %v66
  %v70 = vunpack.c.l.b16 %v68
  %v71 = vunpack.c.h.b16 %v68
  %v72 = vpack.c.b16 %v70, %v70
  %v73 = vpack.c.b16 %v71, %v71
  %76 = vst [vmem:[%s4] sm:$0xf] %v72
  %77 = vst [vmem:[%s4 + $0x4] sm:$0xf] %v73
  // Predicated region
  $region18: #{distilbert_wrapper_forward.19} parent=0 // pred_check
    _
  $region19: #{distilbert_wrapper_forward.19} parent=0 // pred_check_branch
    %79 = sbr.rel (0) target = $region21
  $region20: #{distilbert_wrapper_forward.19} parent=0 // pred_region
    _
  $region21: #{distilbert_wrapper_forward.19} parent=0 // pred_fallthru
    _
  // Predicated region
  $region22: #{distilbert_wrapper_forward.19} parent=0 // pred_check
    _
  $region23: #{distilbert_wrapper_forward.19} parent=0 // pred_check_branch
    %81 = sbr.rel (0) target = $region25
  $region24: #{distilbert_wrapper_forward.19} parent=0 // pred_region
    _
  $region25: #{distilbert_wrapper_forward.19} parent=0 // pred_fallthru
    _

// kernel: distilbert_wrapper_forward.29
$region0: #{distilbert_wrapper_forward.29}
  #allocation0 [shape = 'u32[]', space=smem, size = 0x4, offset = 0x4, fixed_abs, tag = 'smem constant byte address 0x4 - core index']
  #allocation1 [shape = 'u32[144,128]{1,0:T(1,128)}', space=vmem, size = 0x12000, scoped, tag = 'internal scratch']
  %s0 = inlined_call_operand.vmem [shape: bf16[16,128], index: 0, kind: input, shape index: {}]
  %s1 = inlined_call_operand.vmem [shape: bf16[16,128], index: 1, kind: input, shape index: {}]
  %s2 = inlined_call_operand.vmem [shape: f32[1,128], index: 2, kind: input, shape index: {}]
  %s3 = inlined_call_operand.vmem [shape: f32[1,128], index: 3, kind: input, shape index: {}]
  %s4 = inlined_call_operand.vmem [shape: f32[16,128], index: 4, kind: output, shape index: {}]
  %s5 = sld [smem:[#allocation0]]
  $region26: #{distilbert_wrapper_forward.29} parent=0
    _
  %s7 = ssub.s32 1, %s5
  %s8 = scalar_select 0, %s7, %s5
  // Predicated region
  $region2: #{distilbert_wrapper_forward.29} parent=0 // pred_check
    _
  $region3: #{distilbert_wrapper_forward.29} parent=0 // pred_check_branch
    %10 = sbr.rel (0) target = $region5
  $region4: #{distilbert_wrapper_forward.29} parent=0 // pred_region
    _
  $region5: #{distilbert_wrapper_forward.29} parent=0 // pred_fallthru
    _
  // Predicated region
  $region6: #{distilbert_wrapper_forward.29} parent=0 // pred_check
    _
  $region7: #{distilbert_wrapper_forward.29} parent=0 // pred_check_branch
    %12 = sbr.rel (0) target = $region9
  $region8: #{distilbert_wrapper_forward.29} parent=0 // pred_region
    _
  $region9: #{distilbert_wrapper_forward.29} parent=0 // pred_fallthru
    _
  // Predicated region
  $region10: #{distilbert_wrapper_forward.29} parent=0 // pred_check
    _
  $region11: #{distilbert_wrapper_forward.29} parent=0 // pred_check_branch
    %14 = sbr.rel (0) target = $region13
  $region12: #{distilbert_wrapper_forward.29} parent=0 // pred_region
    _
  $region13: #{distilbert_wrapper_forward.29} parent=0 // pred_fallthru
    _
  // Predicated region
  $region14: #{distilbert_wrapper_forward.29} parent=0 // pred_check
    _
  $region15: #{distilbert_wrapper_forward.29} parent=0 // pred_check_branch
    %16 = sbr.rel (0) target = $region17
  $region16: #{distilbert_wrapper_forward.29} parent=0 // pred_region
    _
  $region17: #{distilbert_wrapper_forward.29} parent=0 // pred_fallthru
    _
  %v17 = vld [vmem:[%s0] sm:$0xf]
  %v18 = vld [vmem:[%s0 + $0x4] sm:$0xf]
  %v19 = vunpack.c.l.bf16 %v17
  %v20 = vunpack.c.l.bf16 %v18
  %v21 = vld [vmem:[%s1] sm:$0xf]
  %v22 = vld [vmem:[%s1 + $0x4] sm:$0xf]
  %v23 = vunpack.c.l.bf16 %v21
  %v24 = vunpack.c.l.bf16 %v22
  %v25 = vadd.f32 %v19, %v23
  %v26 = vadd.f32 %v20, %v24
  %27 = vadd.xlane.f32.xlu0 %v25
  %v28 = vpop.xlane.xlu0 %27
  %29 = vadd.xlane.f32.xlu0 %v26
  %v30 = vpop.xlane.xlu0 %29
  %v31 = vrcp.pop 128.0
  %v32 = vmul.f32 %v28, %v31
  %v33 = vmul.f32 %v30, %v31
  %v34 = vsub.f32 %v25, %v32
  %v35 = vsub.f32 %v26, %v33
  %v36 = vmul.f32 %v34, %v34
  %v37 = vmul.f32 %v35, %v35
  %38 = vadd.xlane.f32.xlu0 %v36
  %v39 = vpop.xlane.xlu0 %38
  %40 = vadd.xlane.f32.xlu0 %v37
  %v41 = vpop.xlane.xlu0 %40
  %v42 = vmul.f32 %v39, %v31
  %v43 = vmul.f32 %v41, %v31
  %v44 = vadd.f32 %v42, 1e-12
  %v45 = vadd.f32 %v43, 1e-12
  %v46 = vrsqrt.pop %v44
  %v47 = vrsqrt.pop %v45
  %v48 = vmul.f32 %v34, %v46
  %v49 = vmul.f32 %v35, %v47
  %v50 = vld [vmem:[%s2] sm:$0x1]
  %v52 = vlaneseq
  %v53 = vshrl.u32 %v52, 7
  %v54 = vsub.s32 0, %v53
  %v55 = vrot.slane %v50, %v54
  %v57 = vmul.f32 %v48, %v55
  %v58 = vmul.f32 %v49, %v55
  %v59 = vld [vmem:[%s3] sm:$0x1]
  %v61 = vlaneseq
  %v62 = vshrl.u32 %v61, 7
  %v63 = vsub.s32 0, %v62
  %v64 = vrot.slane %v59, %v63
  %v66 = vadd.f32 %v57, %v64
  %v67 = vadd.f32 %v58, %v64
  %68 = vst [vmem:[%s4] sm:$0xff] %v66
  %69 = vst [vmem:[%s4 + $0x8] sm:$0xff] %v67
  // Predicated region
  $region18: #{distilbert_wrapper_forward.29} parent=0 // pred_check
    _
  $region19: #{distilbert_wrapper_forward.29} parent=0 // pred_check_branch
    %71 = sbr.rel (0) target = $region21
  $region20: #{distilbert_wrapper_forward.29} parent=0 // pred_region
    _
  $region21: #{distilbert_wrapper_forward.29} parent=0 // pred_fallthru
    _
  // Predicated region
  $region22: #{distilbert_wrapper_forward.29} parent=0 // pred_check
    _
  $region23: #{distilbert_wrapper_forward.29} parent=0 // pred_check_branch
    %73 = sbr.rel (0) target = $region25
  $region24: #{distilbert_wrapper_forward.29} parent=0 // pred_region
    _
  $region25: #{distilbert_wrapper_forward.29} parent=0 // pred_fallthru
    _

// kernel: distilbert_wrapper_forward.21
$region0: #{distilbert_wrapper_forward.21}
  #allocation0 [shape = 'u32[]', space=smem, size = 0x4, offset = 0x4, fixed_abs, tag = 'smem constant byte address 0x4 - core index']
  #allocation1 [shape = 'u32[144,128]{1,0:T(1,128)}', space=vmem, size = 0x12000, scoped, tag = 'internal scratch']
  %s0 = inlined_call_operand.vmem [shape: bf16[16,256], index: 0, kind: input, shape index: {}]
  %s1 = inlined_call_operand.vmem [shape: bf16[256,128], index: 1, kind: input, shape index: {}]
  %s2 = inlined_call_operand.vmem [shape: f32[1,128], index: 2, kind: input, shape index: {}]
  %s3 = inlined_call_operand.vmem [shape: bf16[16,128], index: 3, kind: output, shape index: {}]
  %s4 = sld [smem:[#allocation0]]
  $region22: #{distilbert_wrapper_forward.21} parent=0
    _
  %s6 = ssub.s32 1, %s4
  %s7 = scalar_select 0, %s6, %s4
  // Predicated region
  $region2: #{distilbert_wrapper_forward.21} parent=0 // pred_check
    _
  $region3: #{distilbert_wrapper_forward.21} parent=0 // pred_check_branch
    %9 = sbr.rel (0) target = $region5
  $region4: #{distilbert_wrapper_forward.21} parent=0 // pred_region
    _
  $region5: #{distilbert_wrapper_forward.21} parent=0 // pred_fallthru
    _
  // Predicated region
  $region6: #{distilbert_wrapper_forward.21} parent=0 // pred_check
    _
  $region7: #{distilbert_wrapper_forward.21} parent=0 // pred_check_branch
    %11 = sbr.rel (0) target = $region9
  $region8: #{distilbert_wrapper_forward.21} parent=0 // pred_region
    _
  $region9: #{distilbert_wrapper_forward.21} parent=0 // pred_fallthru
    _
  // Predicated region
  $region10: #{distilbert_wrapper_forward.21} parent=0 // pred_check
    _
  $region11: #{distilbert_wrapper_forward.21} parent=0 // pred_check_branch
    %13 = sbr.rel (0) target = $region13
  $region12: #{distilbert_wrapper_forward.21} parent=0 // pred_region
    _
  $region13: #{distilbert_wrapper_forward.21} parent=0 // pred_fallthru
    _
  %v15 = vld [vmem:[%s0] sm:$0xff]
  %v16 = vld [vmem:[%s0 + $0x8] sm:$0xff]
  %v17 = vld [vmem:[%s1] sm:$0xf]
  %v18 = vld [vmem:[%s1 + $0x4] sm:$0xf]
  %v19 = vld [vmem:[%s1 + $0x8] sm:$0xf]
  %v20 = vld [vmem:[%s1 + $0xc] sm:$0xf]
  %v21 = vld [vmem:[%s1 + $0x10] sm:$0xf]
  %v22 = vld [vmem:[%s1 + $0x14] sm:$0xf]
  %v23 = vld [vmem:[%s1 + $0x18] sm:$0xf]
  %v24 = vld [vmem:[%s1 + $0x1c] sm:$0xf]
  %v25 = vld [vmem:[%s1 + $0x20] sm:$0xf]
  %v26 = vld [vmem:[%s1 + $0x24] sm:$0xf]
  %v27 = vld [vmem:[%s1 + $0x28] sm:$0xf]
  %v28 = vld [vmem:[%s1 + $0x2c] sm:$0xf]
  %v29 = vld [vmem:[%s1 + $0x30] sm:$0xf]
  %v30 = vld [vmem:[%s1 + $0x34] sm:$0xf]
  %v31 = vld [vmem:[%s1 + $0x38] sm:$0xf]
  %v32 = vld [vmem:[%s1 + $0x3c] sm:$0xf]
  %v33 = vld [vmem:[%s1 + $0x40] sm:$0xf]
  %v34 = vld [vmem:[%s1 + $0x44] sm:$0xf]
  %v35 = vld [vmem:[%s1 + $0x48] sm:$0xf]
  %v36 = vld [vmem:[%s1 + $0x4c] sm:$0xf]
  %v37 = vld [vmem:[%s1 + $0x50] sm:$0xf]
  %v38 = vld [vmem:[%s1 + $0x54] sm:$0xf]
  %v39 = vld [vmem:[%s1 + $0x58] sm:$0xf]
  %v40 = vld [vmem:[%s1 + $0x5c] sm:$0xf]
  %v41 = vld [vmem:[%s1 + $0x60] sm:$0xf]
  %v42 = vld [vmem:[%s1 + $0x64] sm:$0xf]
  %v43 = vld [vmem:[%s1 + $0x68] sm:$0xf]
  %v44 = vld [vmem:[%s1 + $0x6c] sm:$0xf]
  %v45 = vld [vmem:[%s1 + $0x70] sm:$0xf]
  %v46 = vld [vmem:[%s1 + $0x74] sm:$0xf]
  %v47 = vld [vmem:[%s1 + $0x78] sm:$0xf]
  %v48 = vld [vmem:[%s1 + $0x7c] sm:$0xf]
  %v49 = vld [vmem:[%s2] sm:$0x1]
  %v51 = vlaneseq
  %v52 = vshrl.u32 %v51, 7
  %v53 = vsub.s32 0, %v52
  %v54 = vrot.slane %v49, %v53
  %v58 = vunpack.c.l.b16 %v15
  %v59 = vunpack.c.h.b16 %v15
  %v60 = vunpack.c.l.b16 %v16
  %v61 = vunpack.c.h.b16 %v16
  %v62 = vpack.c.b16 %v60, %v58
  %v63 = vpack.c.b16 %v61, %v59
  %v98 = vunpack.c.l.b16 %v17
  %v99 = vunpack.c.l.b16 %v18
  %v100 = vunpack.c.l.b16 %v19
  %v101 = vunpack.c.l.b16 %v20
  %v102 = vunpack.c.l.b16 %v21
  %v103 = vunpack.c.l.b16 %v22
  %v104 = vunpack.c.l.b16 %v23
  %v105 = vunpack.c.l.b16 %v24
  %v106 = vunpack.c.l.b16 %v25
  %v107 = vunpack.c.l.b16 %v26
  %v108 = vunpack.c.l.b16 %v27
  %v109 = vunpack.c.l.b16 %v28
  %v110 = vunpack.c.l.b16 %v29
  %v111 = vunpack.c.l.b16 %v30
  %v112 = vunpack.c.l.b16 %v31
  %v113 = vunpack.c.l.b16 %v32
  %v114 = vunpack.c.l.b16 %v33
  %v115 = vunpack.c.l.b16 %v34
  %v116 = vunpack.c.l.b16 %v35
  %v117 = vunpack.c.l.b16 %v36
  %v118 = vunpack.c.l.b16 %v37
  %v119 = vunpack.c.l.b16 %v38
  %v120 = vunpack.c.l.b16 %v39
  %v121 = vunpack.c.l.b16 %v40
  %v122 = vunpack.c.l.b16 %v41
  %v123 = vunpack.c.l.b16 %v42
  %v124 = vunpack.c.l.b16 %v43
  %v125 = vunpack.c.l.b16 %v44
  %v126 = vunpack.c.l.b16 %v45
  %v127 = vunpack.c.l.b16 %v46
  %v128 = vunpack.c.l.b16 %v47
  %v129 = vunpack.c.l.b16 %v48
  %v130 = vpack.c.b16 %v99, %v98
  %v131 = vpack.c.b16 %v101, %v100
  %v132 = vpack.c.b16 %v103, %v102
  %v133 = vpack.c.b16 %v105, %v104
  %v134 = vpack.c.b16 %v107, %v106
  %v135 = vpack.c.b16 %v109, %v108
  %v136 = vpack.c.b16 %v111, %v110
  %v137 = vpack.c.b16 %v113, %v112
  %v138 = vpack.c.b16 %v115, %v114
  %v139 = vpack.c.b16 %v117, %v116
  %v140 = vpack.c.b16 %v119, %v118
  %v141 = vpack.c.b16 %v121, %v120
  %v142 = vpack.c.b16 %v123, %v122
  %v143 = vpack.c.b16 %v125, %v124
  %v144 = vpack.c.b16 %v127, %v126
  %v145 = vpack.c.b16 %v129, %v128
  %162 = vmatprep.subr.bf16.mxu0 0
  %163 = vmatpush1.bf16.msra.mxu0 %v130
  %164 = vmatprep.subr.bf16.mxu0 0
  %165 = vmatpush1.bf16.msra.mxu0 %v131
  %166 = vmatprep.subr.bf16.mxu0 0
  %167 = vmatpush1.bf16.msra.mxu0 %v132
  %168 = vmatprep.subr.bf16.mxu0 0
  %169 = vmatpush1.bf16.msra.mxu0 %v133
  %170 = vmatprep.subr.bf16.mxu0 0
  %171 = vmatpush1.bf16.msra.mxu0 %v134
  %172 = vmatprep.subr.bf16.mxu0 0
  %173 = vmatpush1.bf16.msra.mxu0 %v135
  %174 = vmatprep.subr.bf16.mxu0 0
  %175 = vmatpush1.bf16.msra.mxu0 %v136
  %176 = vmatprep.subr.bf16.mxu0 0
  %177 = vmatpush1.bf16.msra.mxu0 %v137
  %178 = vmatprep.subr.bf16.mxu0 0
  %179 = vmatpush1.bf16.msra.mxu0 %v138
  %180 = vmatprep.subr.bf16.mxu0 0
  %181 = vmatpush1.bf16.msra.mxu0 %v139
  %182 = vmatprep.subr.bf16.mxu0 0
  %183 = vmatpush1.bf16.msra.mxu0 %v140
  %184 = vmatprep.subr.bf16.mxu0 0
  %185 = vmatpush1.bf16.msra.mxu0 %v141
  %186 = vmatprep.subr.bf16.mxu0 0
  %187 = vmatpush1.bf16.msra.mxu0 %v142
  %188 = vmatprep.subr.bf16.mxu0 0
  %189 = vmatpush1.bf16.msra.mxu0 %v143
  %190 = vmatprep.subr.bf16.mxu0 0
  %191 = vmatpush1.bf16.msra.mxu0 %v144
  %192 = vmatprep.subr.bf16.mxu0 0
  %193 = vmatpush1.bf16.msra.mxu0 %v145
  %194 = vmatprep.mubr.bf16.mxu0 %v63
  %195 = vmatmul.mubr.bf16.gmra.mrb[0].mxu0 %v62
  %v196 = vpop.f32.mrb[0].mxu0
  %v197 = vadd.f32 %v54, %v196
  %v198 = vpop.f32.mrb[0].mxu0
  %v199 = vpop.f32.mrb[0].mxu0
  %v200 = vadd.f32 %v54, %v199
  %v201 = vpop.f32.mrb[0].mxu0
  %202 = vdwg.mxu0
  %v203 = vpack.c.bf16 %v200, %v197
  %v205 = vunpack.c.l.b16 %v203
  %v206 = vunpack.c.h.b16 %v203
  %v207 = vpack.c.b16 %v205, %v205
  %v208 = vpack.c.b16 %v206, %v206
  %211 = vst [vmem:[%s3] sm:$0xf] %v207
  %212 = vst [vmem:[%s3 + $0x4] sm:$0xf] %v208
  // Predicated region
  $region14: #{distilbert_wrapper_forward.21} parent=0 // pred_check
    _
  $region15: #{distilbert_wrapper_forward.21} parent=0 // pred_check_branch
    %214 = sbr.rel (0) target = $region17
  $region16: #{distilbert_wrapper_forward.21} parent=0 // pred_region
    _
  $region17: #{distilbert_wrapper_forward.21} parent=0 // pred_fallthru
    _
  // Predicated region
  $region18: #{distilbert_wrapper_forward.21} parent=0 // pred_check
    _
  $region19: #{distilbert_wrapper_forward.21} parent=0 // pred_check_branch
    %216 = sbr.rel (0) target = $region21
  $region20: #{distilbert_wrapper_forward.21} parent=0 // pred_region
    _
  $region21: #{distilbert_wrapper_forward.21} parent=0 // pred_fallthru
    _

// kernel: distilbert_wrapper_forward.20
$region0: #{distilbert_wrapper_forward.20}
  #allocation0 [shape = 'u32[]', space=smem, size = 0x4, offset = 0x4, fixed_abs, tag = 'smem constant byte address 0x4 - core index']
  #allocation1 [shape = 'u32[144,128]{1,0:T(1,128)}', space=vmem, size = 0x12000, scoped, tag = 'internal scratch']
  %s0 = inlined_call_operand.vmem [shape: bf16[16,128], index: 0, kind: input, shape index: {}]
  %s1 = inlined_call_operand.vmem [shape: bf16[128,256], index: 1, kind: input, shape index: {}]
  %s2 = inlined_call_operand.vmem [shape: f32[1,256], index: 2, kind: input, shape index: {}]
  %s3 = inlined_call_operand.vmem [shape: bf16[16,256], index: 3, kind: output, shape index: {}]
  %s4 = sld [smem:[#allocation0]]
  $region22: #{distilbert_wrapper_forward.20} parent=0
    _
  %s6 = ssub.s32 1, %s4
  %s7 = scalar_select 0, %s6, %s4
  // Predicated region
  $region2: #{distilbert_wrapper_forward.20} parent=0 // pred_check
    _
  $region3: #{distilbert_wrapper_forward.20} parent=0 // pred_check_branch
    %9 = sbr.rel (0) target = $region5
  $region4: #{distilbert_wrapper_forward.20} parent=0 // pred_region
    _
  $region5: #{distilbert_wrapper_forward.20} parent=0 // pred_fallthru
    _
  // Predicated region
  $region6: #{distilbert_wrapper_forward.20} parent=0 // pred_check
    _
  $region7: #{distilbert_wrapper_forward.20} parent=0 // pred_check_branch
    %11 = sbr.rel (0) target = $region9
  $region8: #{distilbert_wrapper_forward.20} parent=0 // pred_region
    _
  $region9: #{distilbert_wrapper_forward.20} parent=0 // pred_fallthru
    _
  // Predicated region
  $region10: #{distilbert_wrapper_forward.20} parent=0 // pred_check
    _
  $region11: #{distilbert_wrapper_forward.20} parent=0 // pred_check_branch
    %13 = sbr.rel (0) target = $region13
  $region12: #{distilbert_wrapper_forward.20} parent=0 // pred_region
    _
  $region13: #{distilbert_wrapper_forward.20} parent=0 // pred_fallthru
    _
  %v15 = vld [vmem:[%s0] sm:$0xf]
  %v16 = vld [vmem:[%s0 + $0x4] sm:$0xf]
  %v17 = vld [vmem:[%s1] sm:$0xff]
  %v18 = vld [vmem:[%s1 + $0x8] sm:$0xff]
  %v19 = vld [vmem:[%s1 + $0x10] sm:$0xff]
  %v20 = vld [vmem:[%s1 + $0x18] sm:$0xff]
  %v21 = vld [vmem:[%s1 + $0x20] sm:$0xff]
  %v22 = vld [vmem:[%s1 + $0x28] sm:$0xff]
  %v23 = vld [vmem:[%s1 + $0x30] sm:$0xff]
  %v24 = vld [vmem:[%s1 + $0x38] sm:$0xff]
  %v25 = vld [vmem:[%s1 + $0x40] sm:$0xff]
  %v26 = vld [vmem:[%s1 + $0x48] sm:$0xff]
  %v27 = vld [vmem:[%s1 + $0x50] sm:$0xff]
  %v28 = vld [vmem:[%s1 + $0x58] sm:$0xff]
  %v29 = vld [vmem:[%s1 + $0x60] sm:$0xff]
  %v30 = vld [vmem:[%s1 + $0x68] sm:$0xff]
  %v31 = vld [vmem:[%s1 + $0x70] sm:$0xff]
  %v32 = vld [vmem:[%s1 + $0x78] sm:$0xff]
  %v33 = vld [vmem:[%s2] sm:$0x3]
  %v35 = vlaneseq
  %v36 = vshrl.u32 %v35, 7
  %v37 = vsub.s32 0, %v36
  %v38 = vrot.slane %v33, %v37
  %v39 = vlaneseq
  %v40 = vshrl.u32 %v39, 7
  %v41 = vsub.s32 1, %v40
  %v42 = vrot.slane %v33, %v41
  %v47 = vunpack.c.l.b16 %v15
  %v48 = vunpack.c.l.b16 %v16
  %v49 = vpack.c.b16 %v48, %v47
  %v67 = vunpack.c.l.b16 %v17
  %v68 = vunpack.c.h.b16 %v17
  %v69 = vunpack.c.l.b16 %v18
  %v70 = vunpack.c.h.b16 %v18
  %v71 = vunpack.c.l.b16 %v19
  %v72 = vunpack.c.h.b16 %v19
  %v73 = vunpack.c.l.b16 %v20
  %v74 = vunpack.c.h.b16 %v20
  %v75 = vunpack.c.l.b16 %v21
  %v76 = vunpack.c.h.b16 %v21
  %v77 = vunpack.c.l.b16 %v22
  %v78 = vunpack.c.h.b16 %v22
  %v79 = vunpack.c.l.b16 %v23
  %v80 = vunpack.c.h.b16 %v23
  %v81 = vunpack.c.l.b16 %v24
  %v82 = vunpack.c.h.b16 %v24
  %v83 = vunpack.c.l.b16 %v25
  %v84 = vunpack.c.h.b16 %v25
  %v85 = vunpack.c.l.b16 %v26
  %v86 = vunpack.c.h.b16 %v26
  %v87 = vunpack.c.l.b16 %v27
  %v88 = vunpack.c.h.b16 %v27
  %v89 = vunpack.c.l.b16 %v28
  %v90 = vunpack.c.h.b16 %v28
  %v91 = vunpack.c.l.b16 %v29
  %v92 = vunpack.c.h.b16 %v29
  %v93 = vunpack.c.l.b16 %v30
  %v94 = vunpack.c.h.b16 %v30
  %v95 = vunpack.c.l.b16 %v31
  %v96 = vunpack.c.h.b16 %v31
  %v97 = vunpack.c.l.b16 %v32
  %v98 = vunpack.c.h.b16 %v32
  %v99 = vpack.c.b16 %v69, %v67
  %v100 = vpack.c.b16 %v70, %v68
  %v101 = vpack.c.b16 %v73, %v71
  %v102 = vpack.c.b16 %v74, %v72
  %v103 = vpack.c.b16 %v77, %v75
  %v104 = vpack.c.b16 %v78, %v76
  %v105 = vpack.c.b16 %v81, %v79
  %v106 = vpack.c.b16 %v82, %v80
  %v107 = vpack.c.b16 %v85, %v83
  %v108 = vpack.c.b16 %v86, %v84
  %v109 = vpack.c.b16 %v89, %v87
  %v110 = vpack.c.b16 %v90, %v88
  %v111 = vpack.c.b16 %v93, %v91
  %v112 = vpack.c.b16 %v94, %v92
  %v113 = vpack.c.b16 %v97, %v95
  %v114 = vpack.c.b16 %v98, %v96
  %131 = vmatprep.subr.bf16.mxu0 %v100
  %132 = vmatpush1.bf16.msra.mxu0 %v99
  %133 = vmatprep.subr.bf16.mxu0 %v102
  %134 = vmatpush1.bf16.msra.mxu0 %v101
  %135 = vmatprep.subr.bf16.mxu0 %v104
  %136 = vmatpush1.bf16.msra.mxu0 %v103
  %137 = vmatprep.subr.bf16.mxu0 %v106
  %138 = vmatpush1.bf16.msra.mxu0 %v105
  %139 = vmatprep.subr.bf16.mxu0 %v108
  %140 = vmatpush1.bf16.msra.mxu0 %v107
  %141 = vmatprep.subr.bf16.mxu0 %v110
  %142 = vmatpush1.bf16.msra.mxu0 %v109
  %143 = vmatprep.subr.bf16.mxu0 %v112
  %144 = vmatpush1.bf16.msra.mxu0 %v111
  %145 = vmatprep.subr.bf16.mxu0 %v114
  %146 = vmatpush1.bf16.msra.mxu0 %v113
  %147 = vmatprep.subr.bf16.mxu0 0
  %148 = vmatpush1.bf16.msra.mxu0 0
  %149 = vmatprep.subr.bf16.mxu0 0
  %150 = vmatpush1.bf16.msra.mxu0 0
  %151 = vmatprep.subr.bf16.mxu0 0
  %152 = vmatpush1.bf16.msra.mxu0 0
  %153 = vmatprep.subr.bf16.mxu0 0
  %154 = vmatpush1.bf16.msra.mxu0 0
  %155 = vmatprep.subr.bf16.mxu0 0
  %156 = vmatpush1.bf16.msra.mxu0 0
  %157 = vmatprep.subr.bf16.mxu0 0
  %158 = vmatpush1.bf16.msra.mxu0 0
  %159 = vmatprep.subr.bf16.mxu0 0
  %160 = vmatpush1.bf16.msra.mxu0 0
  %161 = vmatprep.subr.bf16.mxu0 0
  %162 = vmatpush1.bf16.msra.mxu0 0
  %163 = vmatprep.mubr.bf16.mxu0 0
  %164 = vmatmul.mubr.bf16.gmra.mrb[0].mxu0 %v49
  %v165 = vpop.f32.mrb[0].mxu0
  %v166 = vadd.f32 %v38, %v165
  %v167 = vpop.f32.mrb[0].mxu0
  %v168 = vadd.f32 %v42, %v167
  %v169 = vpop.f32.mrb[0].mxu0
  %v170 = vadd.f32 %v38, %v169
  %v171 = vpop.f32.mrb[0].mxu0
  %v172 = vadd.f32 %v42, %v171
  %173 = vdwg.mxu0
  %v174 = vmul.f32 %v166, -1.702
  %v175 = vmul.f32 %v168, -1.702
  %v176 = vmul.f32 %v170, -1.702
  %v177 = vmul.f32 %v172, -1.702
  %v178 = vmul.f32 %v174, 1.442695
  %v179 = vpow.pop %v178
  %v180 = vmul.f32 %v175, 1.442695
  %v181 = vpow.pop %v180
  %v182 = vmul.f32 %v176, 1.442695
  %v183 = vpow.pop %v182
  %v184 = vmul.f32 %v177, 1.442695
  %v185 = vpow.pop %v184
  %v186 = vadd.f32 %v179, 1.0
  %v187 = vadd.f32 %v181, 1.0
  %v188 = vadd.f32 %v183, 1.0
  %v189 = vadd.f32 %v185, 1.0
  %v190 = vrcp.pop %v186
  %v191 = vrcp.pop %v187
  %v192 = vrcp.pop %v188
  %v193 = vrcp.pop %v189
  %v194 = vmul.f32 %v166, %v190
  %v195 = vmul.f32 %v168, %v191
  %v196 = vmul.f32 %v170, %v192
  %v197 = vmul.f32 %v172, %v193
  %v198 = vpack.c.bf16 %v196, %v194
  %v199 = vpack.c.bf16 %v197, %v195
  %v202 = vunpack.c.l.b16 %v198
  %v203 = vunpack.c.l.b16 %v199
  %v204 = vunpack.c.h.b16 %v198
  %v205 = vunpack.c.h.b16 %v199
  %v206 = vpack.c.b16 %v203, %v202
  %v207 = vpack.c.b16 %v205, %v204
  %210 = vst [vmem:[%s3] sm:$0xff] %v206
  %211 = vst [vmem:[%s3 + $0x8] sm:$0xff] %v207
  // Predicated region
  $region14: #{distilbert_wrapper_forward.20} parent=0 // pred_check
    _
  $region15: #{distilbert_wrapper_forward.20} parent=0 // pred_check_branch
    %213 = sbr.rel (0) target = $region17
  $region16: #{distilbert_wrapper_forward.20} parent=0 // pred_region
    _
  $region17: #{distilbert_wrapper_forward.20} parent=0 // pred_fallthru
    _
  // Predicated region
  $region18: #{distilbert_wrapper_forward.20} parent=0 // pred_check
    _
  $region19: #{distilbert_wrapper_forward.20} parent=0 // pred_check_branch
    %215 = sbr.rel (0) target = $region21
  $region20: #{distilbert_wrapper_forward.20} parent=0 // pred_region
    _
  $region21: #{distilbert_wrapper_forward.20} parent=0 // pred_fallthru
    _

</llo_original>
